<compile_context>
chip_gen: v6e
topology: v6e:2x2x1
jax: 0.10.0
libtpu: 0.0.40
codegen_flags: <defaults>
</compile_context>

<pallas_src>
import jax
import jax.numpy as jnp
from jax.experimental import pallas as pl
from jax.experimental.pallas import tpu as pltpu


# ---------------------------------------------------------------------------
# Layer 1: hidden = relu(x @ W1^T + b1), tiled over (batch, input-vocab reduction)
# ---------------------------------------------------------------------------
def layer1_kernel(x_ref, w1_ref, b1_ref, h_ref, acc_ref):
    k = pl.program_id(1)
    nk = pl.num_programs(1)

    @pl.when(k == 0)
    def _init():
        acc_ref[...] = jnp.zeros_like(acc_ref)

    # f32 x tile cast to bf16 in-kernel (cheap VPU work hidden under DMA),
    # bf16 x bf16 -> f32 accumulation on the MXU.
    acc_ref[...] += jnp.dot(x_ref[...].astype(jnp.bfloat16), w1_ref[...],
                            preferred_element_type=jnp.float32)

    @pl.when(k == nk - 1)
    def _finish():
        h = jnp.maximum(acc_ref[...] + b1_ref[...], 0.0)   # bias + ReLU in f32
        h_ref[...] = h.astype(h_ref.dtype)                 # cache hidden as bf16


# ---------------------------------------------------------------------------
# Layer 2: out = hidden @ W2^T + b2, tiled over (batch, output-vocab); K = E in-block
# ---------------------------------------------------------------------------
def layer2_kernel(h_ref, w2_ref, b2_ref, o_ref):
    out = jnp.dot(h_ref[...], w2_ref[...],
                  preferred_element_type=jnp.float32) + b2_ref[...]
    o_ref[...] = out.astype(o_ref.dtype)


# ---------------------------------------------------------------------------
# One-time parameter preparation (outside the per-call hot path): transpose to
# matmul-friendly layouts and cast weights to bf16 for the MXU.
# ---------------------------------------------------------------------------
def prepare_params(w1, b1, w2, b2):
    E, V = w1.shape
    w1_t = w1.T.astype(jnp.bfloat16)              # [V, E]  (x @ W1^T == x @ w1_t)
    w2_t = w2.T.astype(jnp.bfloat16)              # [E, V]
    b1_2d = b1.reshape(1, E).astype(jnp.float32)  # [1, E]
    b2_2d = b2.reshape(1, V).astype(jnp.float32)  # [1, V]
    return w1_t, b1_2d, w2_t, b2_2d


def mlp_forward(x, w1_t, b1_2d, w2_t, b2_2d, *, tm=256, tn=1024, tk=512):
    """Fused-pipeline MLP forward: relu(x @ W1^T + b1) @ W2^T + b2.

    x     : [B, V] f32
    w1_t  : [V, E] bf16 (W1 transposed),  b1_2d: [1, E] f32
    w2_t  : [E, V] bf16 (W2 transposed),  b2_2d: [1, V] f32
    ->      [B, V] f32
    """
    B, V = x.shape
    E = w1_t.shape[1]

    tm = min(tm, B)
    tn = min(tn, V)
    tk = min(tk, V)
    assert B % tm == 0 and V % tn == 0 and V % tk == 0, "shapes must tile evenly"

    # VMEM budget (double-buffered pipeline tiles + scratch), checked vs v7x's 64 MiB:
    #   L1: 2*(tm*tk*4 + tk*E*2 + E*4 + tm*E*2) + tm*E*4   ~ 1.5 MiB at defaults
    #   L2: 2*(tm*E*2 + E*tn*2 + tn*4 + tm*tn*4)           ~ 4.6 MiB at defaults
    compiler_params_l1 = pltpu.CompilerParams(
        dimension_semantics=("parallel", "arbitrary"),
        vmem_limit_bytes=32 * 1024 * 1024,
    )
    compiler_params_l2 = pltpu.CompilerParams(
        dimension_semantics=("parallel", "parallel"),
        vmem_limit_bytes=32 * 1024 * 1024,
    )

    # ---- Layer 1: [B, V] x [V, E] -> hidden [B, E] (bf16) ----
    hidden = pl.pallas_call(
        layer1_kernel,
        out_shape=jax.ShapeDtypeStruct((B, E), jnp.bfloat16),
        grid_spec=pltpu.PrefetchScalarGridSpec(
            num_scalar_prefetch=0,
            grid=(B // tm, V // tk),
            in_specs=[
                pl.BlockSpec((tm, tk), lambda i, k: (i, k)),   # x tile (f32, cast in-kernel)
                pl.BlockSpec((tk, E),  lambda i, k: (k, 0)),   # W1 (K-sliced, bf16)
                pl.BlockSpec((1, E),   lambda i, k: (0, 0)),   # b1
            ],
            out_specs=pl.BlockSpec((tm, E), lambda i, k: (i, 0)),
            scratch_shapes=[pltpu.VMEM((tm, E), jnp.float32)],  # f32 accumulator
        ),
        compiler_params=compiler_params_l1,
    )(x, w1_t, b1_2d)

    # ---- Layer 2: [B, E] x [E, V] -> out [B, V] (f32) ----
    out = pl.pallas_call(
        layer2_kernel,
        out_shape=jax.ShapeDtypeStruct((B, V), jnp.float32),
        grid_spec=pltpu.PrefetchScalarGridSpec(
            num_scalar_prefetch=0,
            grid=(B // tm, V // tn),
            in_specs=[
                pl.BlockSpec((tm, E), lambda i, j: (i, 0)),    # hidden tile (bf16)
                pl.BlockSpec((E, tn), lambda i, j: (0, j)),    # W2 (N-sliced, bf16)
                pl.BlockSpec((1, tn), lambda i, j: (0, j)),    # b2 (N-sliced)
            ],
            out_specs=pl.BlockSpec((tm, tn), lambda i, j: (i, j)),
        ),
        compiler_params=compiler_params_l2,
    )(hidden, w2_t, b2_2d)

    return out


def init_params(key, vocab_size, embedding_dim, dtype=jnp.float32):
    """Deterministic init matching nn.Linear shapes (W: [out, in], b: [out])."""
    k1, k2, k3, k4 = jax.random.split(key, 4)
    bound1 = 1.0 / (vocab_size ** 0.5)
    bound2 = 1.0 / (embedding_dim ** 0.5)
    w1 = jax.random.uniform(k1, (embedding_dim, vocab_size), dtype, -bound1, bound1)
    b1 = jax.random.uniform(k2, (embedding_dim,), dtype, -bound1, bound1)
    w2 = jax.random.uniform(k3, (vocab_size, embedding_dim), dtype, -bound2, bound2)
    b2 = jax.random.uniform(k4, (vocab_size,), dtype, -bound2, bound2)
    return w1, b1, w2, b2


if __name__ == "__main__":
    # Small but non-trivial shapes so both grids are actually exercised:
    #   layer-1 grid = (512/256, 1024/512) = (2, 2)
    #   layer-2 grid = (512/256, 1024/1024) = (2, 1)
    vocab_size = 1024
    embedding_dim = 128
    batch = 512

    key = jax.random.PRNGKey(0)
    kx, kp = jax.random.split(key)

    # Bag-of-words-style dense input over the vocabulary.
    x = jax.random.normal(kx, (batch, vocab_size), dtype=jnp.float32)
    w1, b1, w2, b2 = init_params(kp, vocab_size, embedding_dim)

    # One-time weight prep (transpose + bf16 cast) outside the hot path.
    w1_t, b1_2d, w2_t, b2_2d = prepare_params(w1, b1, w2, b2)

    out = mlp_forward(x, w1_t, b1_2d, w2_t, b2_2d, tm=256, tn=1024, tk=512)
    out = jax.block_until_ready(out)

    # Reference (same math as the PyTorch forward), f32.
    ref = jnp.maximum(x @ w1.T + b1, 0.0) @ w2.T + b2
    assert out.shape == (batch, vocab_size)
    # bf16 matmul operands (incl. cached hidden) with f32 accumulation -> loose tol.
    max_err = float(jnp.max(jnp.abs(out - ref)))
    assert jnp.allclose(out, ref, atol=3e-2, rtol=3e-2), f"max_err={max_err}"

    print("KERNEL_OK")
</pallas_src>

<mosaic_0001>
module attributes {stable_mosaic.version = 11 : i64} {
  func.func @layer1_kernel(%arg0: i32, %arg1: i32, %arg2: memref<256x512xf32, #tpu.memory_space<vmem>>, %arg3: memref<512x128xbf16, #tpu.memory_space<vmem>>, %arg4: memref<1x128xf32, #tpu.memory_space<vmem>>, %arg5: memref<256x128xbf16, #tpu.memory_space<vmem>>, %arg6: memref<256x128xf32, #tpu.memory_space<vmem>>) attributes {dimension_semantics = [#tpu.dimension_semantics<parallel>, #tpu.dimension_semantics<arbitrary>], iteration_bounds = array<i64: 2, 2>, scalar_prefetch = 0 : i64, scratch_operands = 1 : i64, tpu.core_type = #tpu.core_type<tc>, window_params = [{transform_indices = @transform_0, window_bounds = array<i64: 256, 512>}, {transform_indices = @transform_1, window_bounds = array<i64: 512, 128>}, {pipeline_mode = #tpu.pipeline_mode<synchronous>, transform_indices = @transform_2, window_bounds = array<i64: 1, 128>}, {transform_indices = @transform_3, window_bounds = array<i64: 256, 128>}]} {
    %c0_i32 = arith.constant 0 : i32
    %0 = arith.cmpi eq, %arg1, %c0_i32 : i32
    %1 = arith.extui %0 : i1 to i32
    %c0_i32_0 = arith.constant 0 : i32
    %2 = arith.cmpi ne, %1, %c0_i32_0 : i32
    scf.if %2 {
      %cst_9 = arith.constant 0.000000e+00 : f32
      %13 = vector.broadcast %cst_9 : f32 to vector<256x128xf32>
      %c0_10 = arith.constant 0 : index
      %c0_11 = arith.constant 0 : index
      %14 = vector.load %arg6[%c0_10, %c0_11] : memref<256x128xf32, #tpu.memory_space<vmem>>, vector<256x128xf32>
      tpu.vector_store %arg6[%c0_10, %c0_11], %13 {strides = array<i32>} : memref<256x128xf32, #tpu.memory_space<vmem>>, vector<256x128xf32>,
    } else {
    }
    %c0 = arith.constant 0 : index
    %c0_1 = arith.constant 0 : index
    %3 = vector.load %arg6[%c0, %c0_1] : memref<256x128xf32, #tpu.memory_space<vmem>>, vector<256x128xf32>
    %c0_2 = arith.constant 0 : index
    %c0_3 = arith.constant 0 : index
    %4 = vector.load %arg2[%c0_2, %c0_3] : memref<256x512xf32, #tpu.memory_space<vmem>>, vector<256x512xf32>
    %5 = arith.truncf %4 : vector<256x512xf32> to vector<256x512xbf16>
    %c0_4 = arith.constant 0 : index
    %c0_5 = arith.constant 0 : index
    %6 = vector.load %arg3[%c0_4, %c0_5] : memref<512x128xbf16, #tpu.memory_space<vmem>>, vector<512x128xbf16>
    %cst = arith.constant dense<0.000000e+00> : vector<256x128xf32>
    %7 = tpu.matmul %5, %6, %cst {dimension_numbers = #tpu.dot_dimension_numbers<[1], [0], [0], [1], [0, 0, 1, 1], [], []>} : vector<256x512xbf16>, vector<512x128xbf16>, vector<256x128xf32> -> vector<256x128xf32>
    %8 = arith.addf %3, %7 : vector<256x128xf32>
    %c0_6 = arith.constant 0 : index
    %c0_7 = arith.constant 0 : index
    %9 = vector.load %arg6[%c0_6, %c0_7] : memref<256x128xf32, #tpu.memory_space<vmem>>, vector<256x128xf32>
    tpu.vector_store %arg6[%c0_6, %c0_7], %8 {strides = array<i32>} : memref<256x128xf32, #tpu.memory_space<vmem>>, vector<256x128xf32>,
    %c1_i32 = arith.constant 1 : i32
    %10 = arith.cmpi eq, %arg1, %c1_i32 : i32
    %11 = arith.extui %10 : i1 to i32
    %c0_i32_8 = arith.constant 0 : i32
    %12 = arith.cmpi ne, %11, %c0_i32_8 : i32
    scf.if %12 {
      %c0_9 = arith.constant 0 : index
      %c0_10 = arith.constant 0 : index
      %13 = vector.load %arg6[%c0_9, %c0_10] : memref<256x128xf32, #tpu.memory_space<vmem>>, vector<256x128xf32>
      %c0_11 = arith.constant 0 : index
      %c0_12 = arith.constant 0 : index
      %14 = vector.load %arg4[%c0_11, %c0_12] : memref<1x128xf32, #tpu.memory_space<vmem>>, vector<1x128xf32>
      %15 = vector.broadcast %14 : vector<1x128xf32> to vector<256x128xf32>
      %16 = arith.addf %13, %15 : vector<256x128xf32>
      %cst_13 = arith.constant 0.000000e+00 : f32
      %17 = vector.broadcast %cst_13 : f32 to vector<256x128xf32>
      %18 = arith.maximumf %16, %17 : vector<256x128xf32>
      %19 = arith.truncf %18 : vector<256x128xf32> to vector<256x128xbf16>
      %c0_14 = arith.constant 0 : index
      %c0_15 = arith.constant 0 : index
      %20 = vector.load %arg5[%c0_14, %c0_15] : memref<256x128xbf16, #tpu.memory_space<vmem>>, vector<256x128xbf16>
      tpu.vector_store %arg5[%c0_14, %c0_15], %19 {strides = array<i32>} : memref<256x128xbf16, #tpu.memory_space<vmem>>, vector<256x128xbf16>,
    } else {
    }
    return
  }
  func.func @transform_0(%arg0: i32, %arg1: i32) -> (i32, i32) {
    %c0_i32 = arith.constant 0 : i32
    return %arg0, %arg1 : i32, i32
  }
  func.func @transform_1(%arg0: i32, %arg1: i32) -> (i32, i32) {
    %c0_i32 = arith.constant 0 : i32
    %c0_i32_0 = arith.constant 0 : i32
    return %arg1, %c0_i32 : i32, i32
  }
  func.func @transform_2(%arg0: i32, %arg1: i32) -> (i32, i32) {
    %c0_i32 = arith.constant 0 : i32
    %c0_i32_0 = arith.constant 0 : i32
    %c0_i32_1 = arith.constant 0 : i32
    return %c0_i32, %c0_i32_0 : i32, i32
  }
  func.func @transform_3(%arg0: i32, %arg1: i32) -> (i32, i32) {
    %c0_i32 = arith.constant 0 : i32
    %c0_i32_0 = arith.constant 0 : i32
    return %arg0, %c0_i32 : i32, i32
  }
}

</mosaic_0001>

<llo_original>
// kernel: tpu_custom_call.1
$region0: #{tpu_custom_call.1}
  #allocation0 [shape = 'u32[]', space=smem, size = 0x4, offset = 0x4, fixed_abs, tag = 'smem constant byte address 0x4 - core index']
  #allocation1 [shape = 'u32[144,128]{1,0:T(1,128)}', space=vmem, size = 0x12000, scoped, tag = 'internal scratch']
  #allocation2 [shape = 'f32[256,128]{1,0:T(8,128)}', space=vmem, size = 0x20000, scoped, tag = 'scratch operand']
  %s0 = inlined_call_operand.hbm [shape: f32[512,1024], index: 0, kind: input, shape index: {}]
  %s1 = inlined_call_operand.hbm [shape: bf16[1024,128], index: 1, kind: input, shape index: {}]
  %s2 = inlined_call_operand.hbm [shape: f32[1,128], index: 2, kind: input, shape index: {}]
  %s3 = inlined_call_operand.hbm [shape: bf16[512,128], index: 3, kind: output, shape index: {}]
  %s4 = sld [smem:[#allocation0]]
  $region65: #{tpu_custom_call.1} parent=0
    _
  %s6 = ssub.s32 1, %s4
  %s7 = scalar_select 0, %s6, %s4
  $region1: #{tpu_custom_call.1} parent=0
    #allocation3 [shape = 'u8[1048576]{0}', space=vmem, size = 0x100000, scoped, tag = 'input window, operand 0']
    #allocation4 [shape = 's32[2]{0}', space=sflag, size = 0x8, scoped, tag = 'scoped memory for tpu_custom_call.1']
    #allocation5 [shape = 's32[2]{0}', space=sflag, size = 0x8, scoped, tag = 'scoped memory for tpu_custom_call.1']
    #allocation6 [shape = 'u8[262144]{0}', space=vmem, size = 0x40000, scoped, tag = 'input window, operand 1']
    #allocation7 [shape = 's32[2]{0}', space=sflag, size = 0x8, scoped, tag = 'scoped memory for tpu_custom_call.1']
    #allocation8 [shape = 'u8[512]{0}', space=vmem, size = 0x400, scoped, tag = 'input window, operand 2, single buffered']
    #allocation9 [shape = 'u8[131072]{0}', space=vmem, size = 0x20000, scoped, tag = 'output window, operand 0']
    %8 = vsyncpa [#allocation4], 0
    %s9 = scalar_lea.sflag [#allocation4], 1
    %10 = vsyncpa %s9, 0
    %11 = vsyncpa [#allocation7], 0
    %s12 = scalar_lea.sflag [#allocation7], 1
    %13 = vsyncpa %s12, 0
    %14 = vsyncpa [#allocation5], 0
    %s15 = scalar_lea.sflag [#allocation5], 1
    %16 = vsyncpa %s15, 0
    loop: start=0, step=1, limit=6
    $region2: #{tpu_custom_call.1} parent=1 // loop_pre_header
      _
    $region3: #{tpu_custom_call.1} parent=1 // loop_header
      %s18 = sphi 0, %s22
      %p19 = scmp.ge.s32.totalorder %s18, 6
      %s25 = sphi 0, %s37
      %s26 = sphi 0, %s33
      %s27 = sphi 0, %s25
      %s28 = sphi 0, %s26
      %s29 = sphi 0, %s27
      %s30 = sphi 0, %s28
      %s42 = sphi 0, %s44
      %s45 = sphi 0, %s42
      %s46 = sphi 0, %s45
      %s62 = sphi 0, %s46
      %s68 = sphi 0, %s70
      %s71 = sphi 0, %s68
      %s72 = sphi 0, %s71
      %s88 = sphi 0, %s72
      %s92 = sphi 0, %s92
      %s94 = sphi 0, %s92
      %s95 = sphi 0, %s94
      %s109 = sphi 0, %s95
      %s115 = sphi 0, %s117
      %s118 = sphi 0, %s115
      %s119 = sphi 0, %s118
      %s135 = sphi 0, %s119
    $region4: #{tpu_custom_call.1} parent=1 // loop_header_branch
      %21 = sbr.rel (%p19) target = $region8
    $region5: #{tpu_custom_call.1} parent=1 // loop_body
      %s23 = ssub.s32 %s18, 1
      %s24 = ssub.s32 %s18, 2
      %s31 = sadd.s32 1, %s26
      %p32 = scmp.ge.s32.totalorder %s31, 2
      %s33 = scalar_select %p32, 0, %s31
      %s34 = sadd.s32 1, %s25
      %s35 = scalar_select %p32, %s34, %s25
      %p36 = scmp.ge.s32.totalorder %s35, 2
      %s37 = scalar_select %p36, 0, %s35
      %s38 = ssub.s32 %s25, %s37
      %s39 = ssub.s32 %s26, %s33
      %s40 = sor.u32 %s38, %s39
      %p41 = scmp.eq.s32.totalorder %s40, 0
      %s43 = sadd.s32 %s42, 1
      %s44 = scalar_select %p41, %s42, %s43
      %p47 = pneg %p41
      %p48 = scmp.eq.s32.totalorder %s18, 3
      %p49 = por %p47, %p48
      %p50 = scmp.ne.s32.totalorder %s42, %s45
      %p51 = scmp.eq.s32.totalorder %s18, 0
      %p52 = por %p50, %p51
      %p53 = scmp.ne.s32.totalorder %s42, %s45
      %p54 = scmp.eq.s32.totalorder %s23, 3
      %p55 = por %p53, %p54
      %p56 = scmp.ne.s32.totalorder %s45, %s46
      %p57 = scmp.eq.s32.totalorder %s23, 0
      %p58 = por %p56, %p57
      %p59 = scmp.ne.s32.totalorder %s45, %s46
      %p60 = scmp.eq.s32.totalorder %s24, 3
      %p61 = por %p59, %p60
      %p63 = scmp.ne.s32.totalorder %s46, %s62
      %p64 = scmp.eq.s32.totalorder %s24, 0
      %p65 = por %p63, %p64
      %s66 = ssub.s32 %s26, %s33
      %p67 = scmp.eq.s32.totalorder %s66, 0
      %s69 = sadd.s32 %s68, 1
      %s70 = scalar_select %p67, %s68, %s69
      %p73 = pneg %p67
      %p74 = scmp.eq.s32.totalorder %s18, 3
      %p75 = por %p73, %p74
      %p76 = scmp.ne.s32.totalorder %s68, %s71
      %p77 = scmp.eq.s32.totalorder %s18, 0
      %p78 = por %p76, %p77
      %p79 = scmp.ne.s32.totalorder %s68, %s71
      %p80 = scmp.eq.s32.totalorder %s23, 3
      %p81 = por %p79, %p80
      %p82 = scmp.ne.s32.totalorder %s71, %s72
      %p83 = scmp.eq.s32.totalorder %s23, 0
      %p84 = por %p82, %p83
      %p85 = scmp.ne.s32.totalorder %s71, %s72
      %p86 = scmp.eq.s32.totalorder %s24, 3
      %p87 = por %p85, %p86
      %p89 = scmp.ne.s32.totalorder %s72, %s88
      %p90 = scmp.eq.s32.totalorder %s24, 0
      %p91 = por %p89, %p90
      %s93 = sadd.s32 %s92, 1
      %p96 = scmp.eq.s32.totalorder %s18, 3
      %p97 = scmp.ne.s32.totalorder %s92, %s94
      %p98 = scmp.eq.s32.totalorder %s18, 0
      %p99 = por %p97, %p98
      %p100 = scmp.ne.s32.totalorder %s92, %s94
      %p101 = scmp.eq.s32.totalorder %s23, 3
      %p102 = por %p100, %p101
      %p103 = scmp.ne.s32.totalorder %s94, %s95
      %p104 = scmp.eq.s32.totalorder %s23, 0
      %p105 = por %p103, %p104
      %p106 = scmp.ne.s32.totalorder %s94, %s95
      %p107 = scmp.eq.s32.totalorder %s24, 3
      %p108 = por %p106, %p107
      %p110 = scmp.ne.s32.totalorder %s95, %s109
      %p111 = scmp.eq.s32.totalorder %s24, 0
      %p112 = por %p110, %p111
      %s113 = ssub.s32 %s25, %s37
      %p114 = scmp.eq.s32.totalorder %s113, 0
      %s116 = sadd.s32 %s115, 1
      %s117 = scalar_select %p114, %s115, %s116
      %p120 = pneg %p114
      %p121 = scmp.eq.s32.totalorder %s18, 3
      %p122 = por %p120, %p121
      %p123 = scmp.ne.s32.totalorder %s115, %s118
      %p124 = scmp.eq.s32.totalorder %s18, 0
      %p125 = por %p123, %p124
      %p126 = scmp.ne.s32.totalorder %s115, %s118
      %p127 = scmp.eq.s32.totalorder %s23, 3
      %p128 = por %p126, %p127
      %p129 = scmp.ne.s32.totalorder %s118, %s119
      %p130 = scmp.eq.s32.totalorder %s23, 0
      %p131 = por %p129, %p130
      %p132 = scmp.ne.s32.totalorder %s118, %s119
      %p133 = scmp.eq.s32.totalorder %s24, 3
      %p134 = por %p132, %p133
      %p136 = scmp.ne.s32.totalorder %s119, %s135
      %p137 = scmp.eq.s32.totalorder %s24, 0
      %p138 = por %p136, %p137
      %p139 = scmp.le.s32.totalorder 1, %s18
      %p140 = scmp.lt.s32.totalorder %s18, 5
      %p141 = pnand %p139, %p140
      %p142 = pneg %p141
      // Predicated region
      $region9: #{tpu_custom_call.1} parent=5 // pred_check
        _
      $region10: #{tpu_custom_call.1} parent=5 // pred_check_branch
        %144 = sbr.rel (%p141) target = $region12
      $region11: #{tpu_custom_call.1} parent=5 // pred_region
        %s145 = ssub.s32 %s18, 1
        // Predicated region
        $region13: #{tpu_custom_call.1} parent=11 // pred_check
          %p146 = pneg %p105
        $region14: #{tpu_custom_call.1} parent=11 // pred_check_branch
          %148 = sbr.rel (%p146) target = $region16
        $region15: #{tpu_custom_call.1} parent=11 // pred_region
          %s150 = ssub.s32 16, 16
          %151 = vsyncadd [#allocation7], %s150
          %s153 = sshll.u32 [#allocation8], 4
          %s154 = int_to_ptr.vmem [resolvable:$true] %s153
          %156 = dma.hbm_to_vmem [thread:$0]  %s2, 16, %s154, [#allocation7]
        $region16: #{tpu_custom_call.1} parent=11 // pred_fallthru
          _
      $region12: #{tpu_custom_call.1} parent=5 // pred_fallthru
        _
      %p157 = scmp.lt.s32.totalorder %s18, 4
      // Predicated region
      $region17: #{tpu_custom_call.1} parent=5 // pred_check
        %p158 = pneg %p157
      $region18: #{tpu_custom_call.1} parent=5 // pred_check_branch
        %160 = sbr.rel (%p158) target = $region20
      $region19: #{tpu_custom_call.1} parent=5 // pred_region
        // Predicated region
        $region21: #{tpu_custom_call.1} parent=19 // pred_check
          %p161 = pneg %p52
        $region22: #{tpu_custom_call.1} parent=19 // pred_check_branch
          %163 = sbr.rel (%p161) target = $region24
        $region23: #{tpu_custom_call.1} parent=19 // pred_region
          %s164 = sand.u32 %s42, 1
          %s165 = scalar_lea.sflag [#allocation4], %s164
          %s166 = sand.u32 %s42, 1
          %s167 = smul.addr %s166, 1024
          %s168 = scalar_lea.vmem [#allocation3], %s167
          %s169 = smul.u32 32, %s25
          %s170 = smul.u32 4, %s26
          %s172 = ssub.s32 16384, 16384
          %173 = vsyncadd %s165, %s172
          %s174 = smul.addr %s169, 8
          %s175 = sadd.s32 %s170, %s174
          %s176 = smul.addr %s175, 128
          %s177 = scalar_lea.hbm %s0, %s176
          %s178 = sshll.u32 %s168, 4
          %s179 = int_to_ptr.vmem [resolvable:$true] %s178
          %184 = dma.hbm_to_vmem [thread:$0]  %s177, 16384, %s179, %s165, 1024, 512, 32
        $region24: #{tpu_custom_call.1} parent=19 // pred_fallthru
          _
        // Predicated region
        $region25: #{tpu_custom_call.1} parent=19 // pred_check
          %p185 = pneg %p78
        $region26: #{tpu_custom_call.1} parent=19 // pred_check_branch
          %187 = sbr.rel (%p185) target = $region28
        $region27: #{tpu_custom_call.1} parent=19 // pred_region
          %s188 = sand.u32 %s18, 1
          %s189 = scalar_lea.sflag [#allocation7], %s188
          %s190 = sand.u32 %s68, 1
          %s191 = smul.addr %s190, 256
          %s192 = scalar_lea.vmem [#allocation6], %s191
          %s193 = smul.u32 64, %s26
          %s195 = ssub.s32 4096, 4096
          %196 = vsyncadd %s189, %s195
          %s197 = smul.addr %s193, 64
          %s198 = scalar_lea.hbm %s1, %s197
          %s199 = sshll.u32 %s192, 4
          %s200 = int_to_ptr.vmem [resolvable:$true] %s199
          %205 = dma.hbm_to_vmem [thread:$0]  %s198, 4096, %s200, %s189, 64, 64, 4
        $region28: #{tpu_custom_call.1} parent=19 // pred_fallthru
          _
      $region20: #{tpu_custom_call.1} parent=5 // pred_fallthru
        _
      %p206 = scmp.le.s32.totalorder 1, %s18
      %p207 = scmp.lt.s32.totalorder %s18, 5
      %p208 = pnand %p206, %p207
      %p209 = pneg %p208
      // Predicated region
      $region29: #{tpu_custom_call.1} parent=5 // pred_check
        _
      $region30: #{tpu_custom_call.1} parent=5 // pred_check_branch
        %211 = sbr.rel (%p208) target = $region32
      $region31: #{tpu_custom_call.1} parent=5 // pred_region
        %s212 = ssub.s32 %s18, 1
        %s213 = sand.u32 %s45, 1
        %s214 = scalar_lea.sflag [#allocation4], %s213
        %s215 = sand.u32 %s45, 1
        %s216 = smul.addr %s215, 1024
        %s217 = scalar_lea.vmem [#allocation3], %s216
        // Predicated region
        $region33: #{tpu_custom_call.1} parent=31 // pred_check
          %p218 = pneg %p58
        $region34: #{tpu_custom_call.1} parent=31 // pred_check_branch
          %220 = sbr.rel (%p218) target = $region36
        $region35: #{tpu_custom_call.1} parent=31 // pred_region
          %221 = dma.done %s214, 16384
        $region36: #{tpu_custom_call.1} parent=31 // pred_fallthru
          _
        %s222 = sand.u32 %s23, 1
        %s223 = scalar_lea.sflag [#allocation7], %s222
        %s224 = sand.u32 %s71, 1
        %s225 = smul.addr %s224, 256
        %s226 = scalar_lea.vmem [#allocation6], %s225
        // Predicated region
        $region37: #{tpu_custom_call.1} parent=31 // pred_check
          %p227 = pneg %p84
        $region38: #{tpu_custom_call.1} parent=31 // pred_check_branch
          %229 = sbr.rel (%p227) target = $region40
        $region39: #{tpu_custom_call.1} parent=31 // pred_region
          %230 = dma.done %s223, 4096
        $region40: #{tpu_custom_call.1} parent=31 // pred_fallthru
          _
        // Predicated region
        $region41: #{tpu_custom_call.1} parent=31 // pred_check
          %p231 = pneg %p105
        $region42: #{tpu_custom_call.1} parent=31 // pred_check_branch
          %233 = sbr.rel (%p231) target = $region44
        $region43: #{tpu_custom_call.1} parent=31 // pred_region
          %234 = dma.done [#allocation7], 16
        $region44: #{tpu_custom_call.1} parent=31 // pred_fallthru
          _
        %s235 = sand.u32 %s45, 1
        %s236 = scalar_lea.sflag [#allocation4], %s235
        %s237 = sand.u32 %s45, 1
        %s238 = smul.addr %s237, 1024
        %s239 = scalar_lea.vmem [#allocation3], %s238
        %p240 = pneg %p58
        %p241 = pneg %p55
        %s242 = sand.u32 %s23, 1
        %s243 = scalar_lea.sflag [#allocation7], %s242
        %s244 = sand.u32 %s71, 1
        %s245 = smul.addr %s244, 256
        %s246 = scalar_lea.vmem [#allocation6], %s245
        %p247 = pneg %p84
        %p248 = pneg %p81
        %p249 = pneg %p105
        %p250 = pneg %p102
        %p251 = pneg %p131
        %p252 = pneg %p128
        %s253 = sand.u32 %s118, 1
        %s254 = scalar_lea.sflag [#allocation5], %s253
        %s255 = sand.u32 %s118, 1
        %s256 = smul.addr %s255, 128
        %s257 = scalar_lea.vmem [#allocation9], %s256
        %s258 = smul.u32 32, %s27
        %s259 = smul.u32 4, %s28
        %s260 = smul.u32 64, %s28
        %s261 = smul.u32 32, %s27
        %p263 = scmp.eq.s32.totalorder %s28, 0
        // Predicated region
        $region45: #{tpu_custom_call.1} parent=31 // pred_check
          %p264 = pneg %p263
        $region46: #{tpu_custom_call.1} parent=31 // pred_check_branch
          %266 = sbr.rel (%p264) target = $region48
        $region47: #{tpu_custom_call.1} parent=31 // pred_region
          %267 = vst [vmem:[#allocation2] sm:$0xff] 0.0
          %268 = vst [vmem:[#allocation2 + $0x8] sm:$0xff] 0.0
          %269 = vst [vmem:[#allocation2 + $0x10] sm:$0xff] 0.0
          %270 = vst [vmem:[#allocation2 + $0x18] sm:$0xff] 0.0
          %271 = vst [vmem:[#allocation2 + $0x20] sm:$0xff] 0.0
          %272 = vst [vmem:[#allocation2 + $0x28] sm:$0xff] 0.0
          %273 = vst [vmem:[#allocation2 + $0x30] sm:$0xff] 0.0
          %274 = vst [vmem:[#allocation2 + $0x38] sm:$0xff] 0.0
          %275 = vst [vmem:[#allocation2 + $0x40] sm:$0xff] 0.0
          %276 = vst [vmem:[#allocation2 + $0x48] sm:$0xff] 0.0
          %277 = vst [vmem:[#allocation2 + $0x50] sm:$0xff] 0.0
          %278 = vst [vmem:[#allocation2 + $0x58] sm:$0xff] 0.0
          %279 = vst [vmem:[#allocation2 + $0x60] sm:$0xff] 0.0
          %280 = vst [vmem:[#allocation2 + $0x68] sm:$0xff] 0.0
          %281 = vst [vmem:[#allocation2 + $0x70] sm:$0xff] 0.0
          %282 = vst [vmem:[#allocation2 + $0x78] sm:$0xff] 0.0
          %283 = vst [vmem:[#allocation2 + $0x80] sm:$0xff] 0.0
          %284 = vst [vmem:[#allocation2 + $0x88] sm:$0xff] 0.0
          %285 = vst [vmem:[#allocation2 + $0x90] sm:$0xff] 0.0
          %286 = vst [vmem:[#allocation2 + $0x98] sm:$0xff] 0.0
          %287 = vst [vmem:[#allocation2 + $0xa0] sm:$0xff] 0.0
          %288 = vst [vmem:[#allocation2 + $0xa8] sm:$0xff] 0.0
          %289 = vst [vmem:[#allocation2 + $0xb0] sm:$0xff] 0.0
          %290 = vst [vmem:[#allocation2 + $0xb8] sm:$0xff] 0.0
          %291 = vst [vmem:[#allocation2 + $0xc0] sm:$0xff] 0.0
          %292 = vst [vmem:[#allocation2 + $0xc8] sm:$0xff] 0.0
          %293 = vst [vmem:[#allocation2 + $0xd0] sm:$0xff] 0.0
          %294 = vst [vmem:[#allocation2 + $0xd8] sm:$0xff] 0.0
          %295 = vst [vmem:[#allocation2 + $0xe0] sm:$0xff] 0.0
          %296 = vst [vmem:[#allocation2 + $0xe8] sm:$0xff] 0.0
          %297 = vst [vmem:[#allocation2 + $0xf0] sm:$0xff] 0.0
          %298 = vst [vmem:[#allocation2 + $0xf8] sm:$0xff] 0.0
        $region48: #{tpu_custom_call.1} parent=31 // pred_fallthru
          _
        %v299 = vld [vmem:[#allocation2] sm:$0xff]
        %v300 = vld [vmem:[#allocation2 + $0x8] sm:$0xff]
        %v301 = vld [vmem:[#allocation2 + $0x10] sm:$0xff]
        %v302 = vld [vmem:[#allocation2 + $0x18] sm:$0xff]
        %v303 = vld [vmem:[#allocation2 + $0x20] sm:$0xff]
        %v304 = vld [vmem:[#allocation2 + $0x28] sm:$0xff]
        %v305 = vld [vmem:[#allocation2 + $0x30] sm:$0xff]
        %v306 = vld [vmem:[#allocation2 + $0x38] sm:$0xff]
        %v307 = vld [vmem:[#allocation2 + $0x40] sm:$0xff]
        %v308 = vld [vmem:[#allocation2 + $0x48] sm:$0xff]
        %v309 = vld [vmem:[#allocation2 + $0x50] sm:$0xff]
        %v310 = vld [vmem:[#allocation2 + $0x58] sm:$0xff]
        %v311 = vld [vmem:[#allocation2 + $0x60] sm:$0xff]
        %v312 = vld [vmem:[#allocation2 + $0x68] sm:$0xff]
        %v313 = vld [vmem:[#allocation2 + $0x70] sm:$0xff]
        %v314 = vld [vmem:[#allocation2 + $0x78] sm:$0xff]
        %v315 = vld [vmem:[#allocation2 + $0x80] sm:$0xff]
        %v316 = vld [vmem:[#allocation2 + $0x88] sm:$0xff]
        %v317 = vld [vmem:[#allocation2 + $0x90] sm:$0xff]
        %v318 = vld [vmem:[#allocation2 + $0x98] sm:$0xff]
        %v319 = vld [vmem:[#allocation2 + $0xa0] sm:$0xff]
        %v320 = vld [vmem:[#allocation2 + $0xa8] sm:$0xff]
        %v321 = vld [vmem:[#allocation2 + $0xb0] sm:$0xff]
        %v322 = vld [vmem:[#allocation2 + $0xb8] sm:$0xff]
        %v323 = vld [vmem:[#allocation2 + $0xc0] sm:$0xff]
        %v324 = vld [vmem:[#allocation2 + $0xc8] sm:$0xff]
        %v325 = vld [vmem:[#allocation2 + $0xd0] sm:$0xff]
        %v326 = vld [vmem:[#allocation2 + $0xd8] sm:$0xff]
        %v327 = vld [vmem:[#allocation2 + $0xe0] sm:$0xff]
        %v328 = vld [vmem:[#allocation2 + $0xe8] sm:$0xff]
        %v329 = vld [vmem:[#allocation2 + $0xf0] sm:$0xff]
        %v330 = vld [vmem:[#allocation2 + $0xf8] sm:$0xff]
        %v331 = vld [vmem:[%s217] sm:$0xff]
        %v332 = vld [vmem:[%s217 + $0x8] sm:$0xff]
        %v333 = vld [vmem:[%s217 + $0x10] sm:$0xff]
        %v334 = vld [vmem:[%s217 + $0x18] sm:$0xff]
        %v335 = vld [vmem:[%s217 + $0x20] sm:$0xff]
        %v336 = vld [vmem:[%s217 + $0x28] sm:$0xff]
        %v337 = vld [vmem:[%s217 + $0x30] sm:$0xff]
        %v338 = vld [vmem:[%s217 + $0x38] sm:$0xff]
        %v339 = vld [vmem:[%s217 + $0x40] sm:$0xff]
        %v340 = vld [vmem:[%s217 + $0x48] sm:$0xff]
        %v341 = vld [vmem:[%s217 + $0x50] sm:$0xff]
        %v342 = vld [vmem:[%s217 + $0x58] sm:$0xff]
        %v343 = vld [vmem:[%s217 + $0x60] sm:$0xff]
        %v344 = vld [vmem:[%s217 + $0x68] sm:$0xff]
        %v345 = vld [vmem:[%s217 + $0x70] sm:$0xff]
        %v346 = vld [vmem:[%s217 + $0x78] sm:$0xff]
        %v347 = vld [vmem:[%s217 + $0x80] sm:$0xff]
        %v348 = vld [vmem:[%s217 + $0x88] sm:$0xff]
        %v349 = vld [vmem:[%s217 + $0x90] sm:$0xff]
        %v350 = vld [vmem:[%s217 + $0x98] sm:$0xff]
        %v351 = vld [vmem:[%s217 + $0xa0] sm:$0xff]
        %v352 = vld [vmem:[%s217 + $0xa8] sm:$0xff]
        %v353 = vld [vmem:[%s217 + $0xb0] sm:$0xff]
        %v354 = vld [vmem:[%s217 + $0xb8] sm:$0xff]
        %v355 = vld [vmem:[%s217 + $0xc0] sm:$0xff]
        %v356 = vld [vmem:[%s217 + $0xc8] sm:$0xff]
        %v357 = vld [vmem:[%s217 + $0xd0] sm:$0xff]
        %v358 = vld [vmem:[%s217 + $0xd8] sm:$0xff]
        %v359 = vld [vmem:[%s217 + $0xe0] sm:$0xff]
        %v360 = vld [vmem:[%s217 + $0xe8] sm:$0xff]
        %v361 = vld [vmem:[%s217 + $0xf0] sm:$0xff]
        %v362 = vld [vmem:[%s217 + $0xf8] sm:$0xff]
        %v363 = vld [vmem:[%s217 + $0x100] sm:$0xff]
        %v364 = vld [vmem:[%s217 + $0x108] sm:$0xff]
        %v365 = vld [vmem:[%s217 + $0x110] sm:$0xff]
        %v366 = vld [vmem:[%s217 + $0x118] sm:$0xff]
        %v367 = vld [vmem:[%s217 + $0x120] sm:$0xff]
        %v368 = vld [vmem:[%s217 + $0x128] sm:$0xff]
        %v369 = vld [vmem:[%s217 + $0x130] sm:$0xff]
        %v370 = vld [vmem:[%s217 + $0x138] sm:$0xff]
        %v371 = vld [vmem:[%s217 + $0x140] sm:$0xff]
        %v372 = vld [vmem:[%s217 + $0x148] sm:$0xff]
        %v373 = vld [vmem:[%s217 + $0x150] sm:$0xff]
        %v374 = vld [vmem:[%s217 + $0x158] sm:$0xff]
        %v375 = vld [vmem:[%s217 + $0x160] sm:$0xff]
        %v376 = vld [vmem:[%s217 + $0x168] sm:$0xff]
        %v377 = vld [vmem:[%s217 + $0x170] sm:$0xff]
        %v378 = vld [vmem:[%s217 + $0x178] sm:$0xff]
        %v379 = vld [vmem:[%s217 + $0x180] sm:$0xff]
        %v380 = vld [vmem:[%s217 + $0x188] sm:$0xff]
        %v381 = vld [vmem:[%s217 + $0x190] sm:$0xff]
        %v382 = vld [vmem:[%s217 + $0x198] sm:$0xff]
        %v383 = vld [vmem:[%s217 + $0x1a0] sm:$0xff]
        %v384 = vld [vmem:[%s217 + $0x1a8] sm:$0xff]
        %v385 = vld [vmem:[%s217 + $0x1b0] sm:$0xff]
        %v386 = vld [vmem:[%s217 + $0x1b8] sm:$0xff]
        %v387 = vld [vmem:[%s217 + $0x1c0] sm:$0xff]
        %v388 = vld [vmem:[%s217 + $0x1c8] sm:$0xff]
        %v389 = vld [vmem:[%s217 + $0x1d0] sm:$0xff]
        %v390 = vld [vmem:[%s217 + $0x1d8] sm:$0xff]
        %v391 = vld [vmem:[%s217 + $0x1e0] sm:$0xff]
        %v392 = vld [vmem:[%s217 + $0x1e8] sm:$0xff]
        %v393 = vld [vmem:[%s217 + $0x1f0] sm:$0xff]
        %v394 = vld [vmem:[%s217 + $0x1f8] sm:$0xff]
        %v395 = vld [vmem:[%s217 + $0x200] sm:$0xff]
        %v396 = vld [vmem:[%s217 + $0x208] sm:$0xff]
        %v397 = vld [vmem:[%s217 + $0x210] sm:$0xff]
        %v398 = vld [vmem:[%s217 + $0x218] sm:$0xff]
        %v399 = vld [vmem:[%s217 + $0x220] sm:$0xff]
        %v400 = vld [vmem:[%s217 + $0x228] sm:$0xff]
        %v401 = vld [vmem:[%s217 + $0x230] sm:$0xff]
        %v402 = vld [vmem:[%s217 + $0x238] sm:$0xff]
        %v403 = vld [vmem:[%s217 + $0x240] sm:$0xff]
        %v404 = vld [vmem:[%s217 + $0x248] sm:$0xff]
        %v405 = vld [vmem:[%s217 + $0x250] sm:$0xff]
        %v406 = vld [vmem:[%s217 + $0x258] sm:$0xff]
        %v407 = vld [vmem:[%s217 + $0x260] sm:$0xff]
        %v408 = vld [vmem:[%s217 + $0x268] sm:$0xff]
        %v409 = vld [vmem:[%s217 + $0x270] sm:$0xff]
        %v410 = vld [vmem:[%s217 + $0x278] sm:$0xff]
        %v411 = vld [vmem:[%s217 + $0x280] sm:$0xff]
        %v412 = vld [vmem:[%s217 + $0x288] sm:$0xff]
        %v413 = vld [vmem:[%s217 + $0x290] sm:$0xff]
        %v414 = vld [vmem:[%s217 + $0x298] sm:$0xff]
        %v415 = vld [vmem:[%s217 + $0x2a0] sm:$0xff]
        %v416 = vld [vmem:[%s217 + $0x2a8] sm:$0xff]
        %v417 = vld [vmem:[%s217 + $0x2b0] sm:$0xff]
        %v418 = vld [vmem:[%s217 + $0x2b8] sm:$0xff]
        %v419 = vld [vmem:[%s217 + $0x2c0] sm:$0xff]
        %v420 = vld [vmem:[%s217 + $0x2c8] sm:$0xff]
        %v421 = vld [vmem:[%s217 + $0x2d0] sm:$0xff]
        %v422 = vld [vmem:[%s217 + $0x2d8] sm:$0xff]
        %v423 = vld [vmem:[%s217 + $0x2e0] sm:$0xff]
        %v424 = vld [vmem:[%s217 + $0x2e8] sm:$0xff]
        %v425 = vld [vmem:[%s217 + $0x2f0] sm:$0xff]
        %v426 = vld [vmem:[%s217 + $0x2f8] sm:$0xff]
        %v427 = vld [vmem:[%s217 + $0x300] sm:$0xff]
        %v428 = vld [vmem:[%s217 + $0x308] sm:$0xff]
        %v429 = vld [vmem:[%s217 + $0x310] sm:$0xff]
        %v430 = vld [vmem:[%s217 + $0x318] sm:$0xff]
        %v431 = vld [vmem:[%s217 + $0x320] sm:$0xff]
        %v432 = vld [vmem:[%s217 + $0x328] sm:$0xff]
        %v433 = vld [vmem:[%s217 + $0x330] sm:$0xff]
        %v434 = vld [vmem:[%s217 + $0x338] sm:$0xff]
        %v435 = vld [vmem:[%s217 + $0x340] sm:$0xff]
        %v436 = vld [vmem:[%s217 + $0x348] sm:$0xff]
        %v437 = vld [vmem:[%s217 + $0x350] sm:$0xff]
        %v438 = vld [vmem:[%s217 + $0x358] sm:$0xff]
        %v439 = vld [vmem:[%s217 + $0x360] sm:$0xff]
        %v440 = vld [vmem:[%s217 + $0x368] sm:$0xff]
        %v441 = vld [vmem:[%s217 + $0x370] sm:$0xff]
        %v442 = vld [vmem:[%s217 + $0x378] sm:$0xff]
        %v443 = vld [vmem:[%s217 + $0x380] sm:$0xff]
        %v444 = vld [vmem:[%s217 + $0x388] sm:$0xff]
        %v445 = vld [vmem:[%s217 + $0x390] sm:$0xff]
        %v446 = vld [vmem:[%s217 + $0x398] sm:$0xff]
        %v447 = vld [vmem:[%s217 + $0x3a0] sm:$0xff]
        %v448 = vld [vmem:[%s217 + $0x3a8] sm:$0xff]
        %v449 = vld [vmem:[%s217 + $0x3b0] sm:$0xff]
        %v450 = vld [vmem:[%s217 + $0x3b8] sm:$0xff]
        %v451 = vld [vmem:[%s217 + $0x3c0] sm:$0xff]
        %v452 = vld [vmem:[%s217 + $0x3c8] sm:$0xff]
        %v453 = vld [vmem:[%s217 + $0x3d0] sm:$0xff]
        %v454 = vld [vmem:[%s217 + $0x3d8] sm:$0xff]
        %v455 = vld [vmem:[%s217 + $0x3e0] sm:$0xff]
        %v456 = vld [vmem:[%s217 + $0x3e8] sm:$0xff]
        %v457 = vld [vmem:[%s217 + $0x3f0] sm:$0xff]
        %v458 = vld [vmem:[%s217 + $0x3f8] sm:$0xff]
        %v459 = vpack.c.bf16 %v335, %v331
        %v460 = vpack.c.bf16 %v336, %v332
        %v461 = vpack.c.bf16 %v337, %v333
        %v462 = vpack.c.bf16 %v338, %v334
        %v463 = vpack.c.bf16 %v343, %v339
        %v464 = vpack.c.bf16 %v344, %v340
        %v465 = vpack.c.bf16 %v345, %v341
        %v466 = vpack.c.bf16 %v346, %v342
        %v467 = vpack.c.bf16 %v351, %v347
        %v468 = vpack.c.bf16 %v352, %v348
        %v469 = vpack.c.bf16 %v353, %v349
        %v470 = vpack.c.bf16 %v354, %v350
        %v471 = vpack.c.bf16 %v359, %v355
        %v472 = vpack.c.bf16 %v360, %v356
        %v473 = vpack.c.bf16 %v361, %v357
        %v474 = vpack.c.bf16 %v362, %v358
        %v475 = vpack.c.bf16 %v367, %v363
        %v476 = vpack.c.bf16 %v368, %v364
        %v477 = vpack.c.bf16 %v369, %v365
        %v478 = vpack.c.bf16 %v370, %v366
        %v479 = vpack.c.bf16 %v375, %v371
        %v480 = vpack.c.bf16 %v376, %v372
        %v481 = vpack.c.bf16 %v377, %v373
        %v482 = vpack.c.bf16 %v378, %v374
        %v483 = vpack.c.bf16 %v383, %v379
        %v484 = vpack.c.bf16 %v384, %v380
        %v485 = vpack.c.bf16 %v385, %v381
        %v486 = vpack.c.bf16 %v386, %v382
        %v487 = vpack.c.bf16 %v391, %v387
        %v488 = vpack.c.bf16 %v392, %v388
        %v489 = vpack.c.bf16 %v393, %v389
        %v490 = vpack.c.bf16 %v394, %v390
        %v491 = vpack.c.bf16 %v399, %v395
        %v492 = vpack.c.bf16 %v400, %v396
        %v493 = vpack.c.bf16 %v401, %v397
        %v494 = vpack.c.bf16 %v402, %v398
        %v495 = vpack.c.bf16 %v407, %v403
        %v496 = vpack.c.bf16 %v408, %v404
        %v497 = vpack.c.bf16 %v409, %v405
        %v498 = vpack.c.bf16 %v410, %v406
        %v499 = vpack.c.bf16 %v415, %v411
        %v500 = vpack.c.bf16 %v416, %v412
        %v501 = vpack.c.bf16 %v417, %v413
        %v502 = vpack.c.bf16 %v418, %v414
        %v503 = vpack.c.bf16 %v423, %v419
        %v504 = vpack.c.bf16 %v424, %v420
        %v505 = vpack.c.bf16 %v425, %v421
        %v506 = vpack.c.bf16 %v426, %v422
        %v507 = vpack.c.bf16 %v431, %v427
        %v508 = vpack.c.bf16 %v432, %v428
        %v509 = vpack.c.bf16 %v433, %v429
        %v510 = vpack.c.bf16 %v434, %v430
        %v511 = vpack.c.bf16 %v439, %v435
        %v512 = vpack.c.bf16 %v440, %v436
        %v513 = vpack.c.bf16 %v441, %v437
        %v514 = vpack.c.bf16 %v442, %v438
        %v515 = vpack.c.bf16 %v447, %v443
        %v516 = vpack.c.bf16 %v448, %v444
        %v517 = vpack.c.bf16 %v449, %v445
        %v518 = vpack.c.bf16 %v450, %v446
        %v519 = vpack.c.bf16 %v455, %v451
        %v520 = vpack.c.bf16 %v456, %v452
        %v521 = vpack.c.bf16 %v457, %v453
        %v522 = vpack.c.bf16 %v458, %v454
        %v523 = vld [vmem:[%s226] sm:$0xf]
        %v524 = vld [vmem:[%s226 + $0x4] sm:$0xf]
        %v525 = vld [vmem:[%s226 + $0x8] sm:$0xf]
        %v526 = vld [vmem:[%s226 + $0xc] sm:$0xf]
        %v527 = vld [vmem:[%s226 + $0x10] sm:$0xf]
        %v528 = vld [vmem:[%s226 + $0x14] sm:$0xf]
        %v529 = vld [vmem:[%s226 + $0x18] sm:$0xf]
        %v530 = vld [vmem:[%s226 + $0x1c] sm:$0xf]
        %v531 = vld [vmem:[%s226 + $0x20] sm:$0xf]
        %v532 = vld [vmem:[%s226 + $0x24] sm:$0xf]
        %v533 = vld [vmem:[%s226 + $0x28] sm:$0xf]
        %v534 = vld [vmem:[%s226 + $0x2c] sm:$0xf]
        %v535 = vld [vmem:[%s226 + $0x30] sm:$0xf]
        %v536 = vld [vmem:[%s226 + $0x34] sm:$0xf]
        %v537 = vld [vmem:[%s226 + $0x38] sm:$0xf]
        %v538 = vld [vmem:[%s226 + $0x3c] sm:$0xf]
        %v539 = vld [vmem:[%s226 + $0x40] sm:$0xf]
        %v540 = vld [vmem:[%s226 + $0x44] sm:$0xf]
        %v541 = vld [vmem:[%s226 + $0x48] sm:$0xf]
        %v542 = vld [vmem:[%s226 + $0x4c] sm:$0xf]
        %v543 = vld [vmem:[%s226 + $0x50] sm:$0xf]
        %v544 = vld [vmem:[%s226 + $0x54] sm:$0xf]
        %v545 = vld [vmem:[%s226 + $0x58] sm:$0xf]
        %v546 = vld [vmem:[%s226 + $0x5c] sm:$0xf]
        %v547 = vld [vmem:[%s226 + $0x60] sm:$0xf]
        %v548 = vld [vmem:[%s226 + $0x64] sm:$0xf]
        %v549 = vld [vmem:[%s226 + $0x68] sm:$0xf]
        %v550 = vld [vmem:[%s226 + $0x6c] sm:$0xf]
        %v551 = vld [vmem:[%s226 + $0x70] sm:$0xf]
        %v552 = vld [vmem:[%s226 + $0x74] sm:$0xf]
        %v553 = vld [vmem:[%s226 + $0x78] sm:$0xf]
        %v554 = vld [vmem:[%s226 + $0x7c] sm:$0xf]
        %v555 = vld [vmem:[%s226 + $0x80] sm:$0xf]
        %v556 = vld [vmem:[%s226 + $0x84] sm:$0xf]
        %v557 = vld [vmem:[%s226 + $0x88] sm:$0xf]
        %v558 = vld [vmem:[%s226 + $0x8c] sm:$0xf]
        %v559 = vld [vmem:[%s226 + $0x90] sm:$0xf]
        %v560 = vld [vmem:[%s226 + $0x94] sm:$0xf]
        %v561 = vld [vmem:[%s226 + $0x98] sm:$0xf]
        %v562 = vld [vmem:[%s226 + $0x9c] sm:$0xf]
        %v563 = vld [vmem:[%s226 + $0xa0] sm:$0xf]
        %v564 = vld [vmem:[%s226 + $0xa4] sm:$0xf]
        %v565 = vld [vmem:[%s226 + $0xa8] sm:$0xf]
        %v566 = vld [vmem:[%s226 + $0xac] sm:$0xf]
        %v567 = vld [vmem:[%s226 + $0xb0] sm:$0xf]
        %v568 = vld [vmem:[%s226 + $0xb4] sm:$0xf]
        %v569 = vld [vmem:[%s226 + $0xb8] sm:$0xf]
        %v570 = vld [vmem:[%s226 + $0xbc] sm:$0xf]
        %v571 = vld [vmem:[%s226 + $0xc0] sm:$0xf]
        %v572 = vld [vmem:[%s226 + $0xc4] sm:$0xf]
        %v573 = vld [vmem:[%s226 + $0xc8] sm:$0xf]
        %v574 = vld [vmem:[%s226 + $0xcc] sm:$0xf]
        %v575 = vld [vmem:[%s226 + $0xd0] sm:$0xf]
        %v576 = vld [vmem:[%s226 + $0xd4] sm:$0xf]
        %v577 = vld [vmem:[%s226 + $0xd8] sm:$0xf]
        %v578 = vld [vmem:[%s226 + $0xdc] sm:$0xf]
        %v579 = vld [vmem:[%s226 + $0xe0] sm:$0xf]
        %v580 = vld [vmem:[%s226 + $0xe4] sm:$0xf]
        %v581 = vld [vmem:[%s226 + $0xe8] sm:$0xf]
        %v582 = vld [vmem:[%s226 + $0xec] sm:$0xf]
        %v583 = vld [vmem:[%s226 + $0xf0] sm:$0xf]
        %v584 = vld [vmem:[%s226 + $0xf4] sm:$0xf]
        %v585 = vld [vmem:[%s226 + $0xf8] sm:$0xf]
        %v586 = vld [vmem:[%s226 + $0xfc] sm:$0xf]
        %v651 = vunpack.c.l.b16 %v523
        %v652 = vunpack.c.l.b16 %v524
        %v653 = vunpack.c.l.b16 %v525
        %v654 = vunpack.c.l.b16 %v526
        %v655 = vunpack.c.l.b16 %v527
        %v656 = vunpack.c.l.b16 %v528
        %v657 = vunpack.c.l.b16 %v529
        %v658 = vunpack.c.l.b16 %v530
        %v659 = vunpack.c.l.b16 %v531
        %v660 = vunpack.c.l.b16 %v532
        %v661 = vunpack.c.l.b16 %v533
        %v662 = vunpack.c.l.b16 %v534
        %v663 = vunpack.c.l.b16 %v535
        %v664 = vunpack.c.l.b16 %v536
        %v665 = vunpack.c.l.b16 %v537
        %v666 = vunpack.c.l.b16 %v538
        %v667 = vunpack.c.l.b16 %v539
        %v668 = vunpack.c.l.b16 %v540
        %v669 = vunpack.c.l.b16 %v541
        %v670 = vunpack.c.l.b16 %v542
        %v671 = vunpack.c.l.b16 %v543
        %v672 = vunpack.c.l.b16 %v544
        %v673 = vunpack.c.l.b16 %v545
        %v674 = vunpack.c.l.b16 %v546
        %v675 = vunpack.c.l.b16 %v547
        %v676 = vunpack.c.l.b16 %v548
        %v677 = vunpack.c.l.b16 %v549
        %v678 = vunpack.c.l.b16 %v550
        %v679 = vunpack.c.l.b16 %v551
        %v680 = vunpack.c.l.b16 %v552
        %v681 = vunpack.c.l.b16 %v553
        %v682 = vunpack.c.l.b16 %v554
        %v683 = vunpack.c.l.b16 %v555
        %v684 = vunpack.c.l.b16 %v556
        %v685 = vunpack.c.l.b16 %v557
        %v686 = vunpack.c.l.b16 %v558
        %v687 = vunpack.c.l.b16 %v559
        %v688 = vunpack.c.l.b16 %v560
        %v689 = vunpack.c.l.b16 %v561
        %v690 = vunpack.c.l.b16 %v562
        %v691 = vunpack.c.l.b16 %v563
        %v692 = vunpack.c.l.b16 %v564
        %v693 = vunpack.c.l.b16 %v565
        %v694 = vunpack.c.l.b16 %v566
        %v695 = vunpack.c.l.b16 %v567
        %v696 = vunpack.c.l.b16 %v568
        %v697 = vunpack.c.l.b16 %v569
        %v698 = vunpack.c.l.b16 %v570
        %v699 = vunpack.c.l.b16 %v571
        %v700 = vunpack.c.l.b16 %v572
        %v701 = vunpack.c.l.b16 %v573
        %v702 = vunpack.c.l.b16 %v574
        %v703 = vunpack.c.l.b16 %v575
        %v704 = vunpack.c.l.b16 %v576
        %v705 = vunpack.c.l.b16 %v577
        %v706 = vunpack.c.l.b16 %v578
        %v707 = vunpack.c.l.b16 %v579
        %v708 = vunpack.c.l.b16 %v580
        %v709 = vunpack.c.l.b16 %v581
        %v710 = vunpack.c.l.b16 %v582
        %v711 = vunpack.c.l.b16 %v583
        %v712 = vunpack.c.l.b16 %v584
        %v713 = vunpack.c.l.b16 %v585
        %v714 = vunpack.c.l.b16 %v586
        %v715 = vpack.c.b16 %v652, %v651
        %v716 = vpack.c.b16 %v654, %v653
        %v717 = vpack.c.b16 %v656, %v655
        %v718 = vpack.c.b16 %v658, %v657
        %v719 = vpack.c.b16 %v660, %v659
        %v720 = vpack.c.b16 %v662, %v661
        %v721 = vpack.c.b16 %v664, %v663
        %v722 = vpack.c.b16 %v666, %v665
        %v723 = vpack.c.b16 %v668, %v667
        %v724 = vpack.c.b16 %v670, %v669
        %v725 = vpack.c.b16 %v672, %v671
        %v726 = vpack.c.b16 %v674, %v673
        %v727 = vpack.c.b16 %v676, %v675
        %v728 = vpack.c.b16 %v678, %v677
        %v729 = vpack.c.b16 %v680, %v679
        %v730 = vpack.c.b16 %v682, %v681
        %v731 = vpack.c.b16 %v684, %v683
        %v732 = vpack.c.b16 %v686, %v685
        %v733 = vpack.c.b16 %v688, %v687
        %v734 = vpack.c.b16 %v690, %v689
        %v735 = vpack.c.b16 %v692, %v691
        %v736 = vpack.c.b16 %v694, %v693
        %v737 = vpack.c.b16 %v696, %v695
        %v738 = vpack.c.b16 %v698, %v697
        %v739 = vpack.c.b16 %v700, %v699
        %v740 = vpack.c.b16 %v702, %v701
        %v741 = vpack.c.b16 %v704, %v703
        %v742 = vpack.c.b16 %v706, %v705
        %v743 = vpack.c.b16 %v708, %v707
        %v744 = vpack.c.b16 %v710, %v709
        %v745 = vpack.c.b16 %v712, %v711
        %v746 = vpack.c.b16 %v714, %v713
        %779 = vmatprep.subr.bf16.mxu0 0
        %780 = vmatpush1.bf16.msra.mxu0 %v722
        %781 = vmatprep.subr.bf16.mxu0 0
        %782 = vmatpush1.bf16.msra.mxu0 %v721
        %783 = vmatprep.subr.bf16.mxu0 0
        %784 = vmatpush1.bf16.msra.mxu0 %v720
        %785 = vmatprep.subr.bf16.mxu0 0
        %786 = vmatpush1.bf16.msra.mxu0 %v719
        %787 = vmatprep.subr.bf16.mxu0 0
        %788 = vmatpush1.bf16.msra.mxu0 %v718
        %789 = vmatprep.subr.bf16.mxu0 0
        %790 = vmatpush1.bf16.msra.mxu0 %v717
        %791 = vmatprep.subr.bf16.mxu0 0
        %792 = vmatpush1.bf16.msra.mxu0 %v716
        %793 = vmatprep.subr.bf16.mxu0 0
        %794 = vmatpush1.bf16.msra.mxu0 %v715
        %795 = vmatprep.subr.bf16.mxu0 0
        %796 = vmatpush2.bf16.msra.mxu0 %v730
        %797 = vmatprep.subr.bf16.mxu0 0
        %798 = vmatpush2.bf16.msra.mxu0 %v729
        %799 = vmatprep.subr.bf16.mxu0 0
        %800 = vmatpush2.bf16.msra.mxu0 %v728
        %801 = vmatprep.subr.bf16.mxu0 0
        %802 = vmatpush2.bf16.msra.mxu0 %v727
        %803 = vmatprep.subr.bf16.mxu0 0
        %804 = vmatpush2.bf16.msra.mxu0 %v726
        %805 = vmatprep.subr.bf16.mxu0 0
        %806 = vmatpush2.bf16.msra.mxu0 %v725
        %807 = vmatprep.subr.bf16.mxu0 0
        %808 = vmatpush2.bf16.msra.mxu0 %v724
        %809 = vmatprep.subr.bf16.mxu0 0
        %810 = vmatpush2.bf16.msra.mxu0 %v723
        %811 = vmatprep.mubr.bf16.mxu0 %v460
        %812 = vmatmul.mubr.bf16.gmra.mxu0 %v459
        %v813 = vpop.f32.mrf.mxu0
        %v814 = vadd.f32 0.0, %v813
        %v815 = vpop.f32.mrf.mxu0
        %v816 = vpop.f32.mrf.mxu0
        %v817 = vadd.f32 0.0, %v816
        %v818 = vpop.f32.mrf.mxu0
        %819 = vmatprep.mubr.bf16.mxu0 %v464
        %820 = vmatmul.mubr.bf16.gmra.mxu0 %v463
        %v821 = vpop.f32.mrf.mxu0
        %v822 = vadd.f32 0.0, %v821
        %v823 = vpop.f32.mrf.mxu0
        %v824 = vpop.f32.mrf.mxu0
        %v825 = vadd.f32 0.0, %v824
        %v826 = vpop.f32.mrf.mxu0
        %827 = vmatprep.mubr.bf16.mxu0 %v468
        %828 = vmatmul.mubr.bf16.gmra.mxu0 %v467
        %v829 = vpop.f32.mrf.mxu0
        %v830 = vadd.f32 0.0, %v829
        %v831 = vpop.f32.mrf.mxu0
        %v832 = vpop.f32.mrf.mxu0
        %v833 = vadd.f32 0.0, %v832
        %v834 = vpop.f32.mrf.mxu0
        %835 = vmatprep.mubr.bf16.mxu0 %v472
        %836 = vmatmul.mubr.bf16.gmra.mxu0 %v471
        %v837 = vpop.f32.mrf.mxu0
        %v838 = vadd.f32 0.0, %v837
        %v839 = vpop.f32.mrf.mxu0
        %v840 = vpop.f32.mrf.mxu0
        %v841 = vadd.f32 0.0, %v840
        %v842 = vpop.f32.mrf.mxu0
        %843 = vmatprep.mubr.bf16.mxu0 %v476
        %844 = vmatmul.mubr.bf16.gmra.mxu0 %v475
        %v845 = vpop.f32.mrf.mxu0
        %v846 = vadd.f32 0.0, %v845
        %v847 = vpop.f32.mrf.mxu0
        %v848 = vpop.f32.mrf.mxu0
        %v849 = vadd.f32 0.0, %v848
        %v850 = vpop.f32.mrf.mxu0
        %851 = vmatprep.mubr.bf16.mxu0 %v480
        %852 = vmatmul.mubr.bf16.gmra.mxu0 %v479
        %v853 = vpop.f32.mrf.mxu0
        %v854 = vadd.f32 0.0, %v853
        %v855 = vpop.f32.mrf.mxu0
        %v856 = vpop.f32.mrf.mxu0
        %v857 = vadd.f32 0.0, %v856
        %v858 = vpop.f32.mrf.mxu0
        %859 = vmatprep.mubr.bf16.mxu0 %v484
        %860 = vmatmul.mubr.bf16.gmra.mxu0 %v483
        %v861 = vpop.f32.mrf.mxu0
        %v862 = vadd.f32 0.0, %v861
        %v863 = vpop.f32.mrf.mxu0
        %v864 = vpop.f32.mrf.mxu0
        %v865 = vadd.f32 0.0, %v864
        %v866 = vpop.f32.mrf.mxu0
        %867 = vmatprep.mubr.bf16.mxu0 %v488
        %868 = vmatmul.mubr.bf16.gmra.mxu0 %v487
        %v869 = vpop.f32.mrf.mxu0
        %v870 = vadd.f32 0.0, %v869
        %v871 = vpop.f32.mrf.mxu0
        %v872 = vpop.f32.mrf.mxu0
        %v873 = vadd.f32 0.0, %v872
        %v874 = vpop.f32.mrf.mxu0
        %875 = vmatprep.mubr.bf16.mxu0 %v492
        %876 = vmatmul.mubr.bf16.gmra.mxu0 %v491
        %v877 = vpop.f32.mrf.mxu0
        %v878 = vadd.f32 0.0, %v877
        %v879 = vpop.f32.mrf.mxu0
        %v880 = vpop.f32.mrf.mxu0
        %v881 = vadd.f32 0.0, %v880
        %v882 = vpop.f32.mrf.mxu0
        %883 = vmatprep.mubr.bf16.mxu0 %v496
        %884 = vmatmul.mubr.bf16.gmra.mxu0 %v495
        %v885 = vpop.f32.mrf.mxu0
        %v886 = vadd.f32 0.0, %v885
        %v887 = vpop.f32.mrf.mxu0
        %v888 = vpop.f32.mrf.mxu0
        %v889 = vadd.f32 0.0, %v888
        %v890 = vpop.f32.mrf.mxu0
        %891 = vmatprep.mubr.bf16.mxu0 %v500
        %892 = vmatmul.mubr.bf16.gmra.mxu0 %v499
        %v893 = vpop.f32.mrf.mxu0
        %v894 = vadd.f32 0.0, %v893
        %v895 = vpop.f32.mrf.mxu0
        %v896 = vpop.f32.mrf.mxu0
        %v897 = vadd.f32 0.0, %v896
        %v898 = vpop.f32.mrf.mxu0
        %899 = vmatprep.mubr.bf16.mxu0 %v504
        %900 = vmatmul.mubr.bf16.gmra.mxu0 %v503
        %v901 = vpop.f32.mrf.mxu0
        %v902 = vadd.f32 0.0, %v901
        %v903 = vpop.f32.mrf.mxu0
        %v904 = vpop.f32.mrf.mxu0
        %v905 = vadd.f32 0.0, %v904
        %v906 = vpop.f32.mrf.mxu0
        %907 = vmatprep.mubr.bf16.mxu0 %v508
        %908 = vmatmul.mubr.bf16.gmra.mxu0 %v507
        %v909 = vpop.f32.mrf.mxu0
        %v910 = vadd.f32 0.0, %v909
        %v911 = vpop.f32.mrf.mxu0
        %v912 = vpop.f32.mrf.mxu0
        %v913 = vadd.f32 0.0, %v912
        %v914 = vpop.f32.mrf.mxu0
        %915 = vmatprep.mubr.bf16.mxu0 %v512
        %916 = vmatmul.mubr.bf16.gmra.mxu0 %v511
        %v917 = vpop.f32.mrf.mxu0
        %v918 = vadd.f32 0.0, %v917
        %v919 = vpop.f32.mrf.mxu0
        %v920 = vpop.f32.mrf.mxu0
        %v921 = vadd.f32 0.0, %v920
        %v922 = vpop.f32.mrf.mxu0
        %923 = vmatprep.mubr.bf16.mxu0 %v516
        %924 = vmatmul.mubr.bf16.gmra.mxu0 %v515
        %v925 = vpop.f32.mrf.mxu0
        %v926 = vadd.f32 0.0, %v925
        %v927 = vpop.f32.mrf.mxu0
        %v928 = vpop.f32.mrf.mxu0
        %v929 = vadd.f32 0.0, %v928
        %v930 = vpop.f32.mrf.mxu0
        %931 = vmatprep.mubr.bf16.mxu0 %v520
        %932 = vmatmul.mubr.bf16.gmra.mxu0 %v519
        %v933 = vpop.f32.mrf.mxu0
        %v934 = vadd.f32 0.0, %v933
        %v935 = vpop.f32.mrf.mxu0
        %v936 = vpop.f32.mrf.mxu0
        %v937 = vadd.f32 0.0, %v936
        %v938 = vpop.f32.mrf.mxu0
        %939 = vdwg.mxu0
        %940 = vmatprep.subr.bf16.mxu0 0
        %941 = vmatpush1.bf16.msra.mxu0 %v738
        %942 = vmatprep.subr.bf16.mxu0 0
        %943 = vmatpush1.bf16.msra.mxu0 %v737
        %944 = vmatprep.subr.bf16.mxu0 0
        %945 = vmatpush1.bf16.msra.mxu0 %v736
        %946 = vmatprep.subr.bf16.mxu0 0
        %947 = vmatpush1.bf16.msra.mxu0 %v735
        %948 = vmatprep.subr.bf16.mxu0 0
        %949 = vmatpush1.bf16.msra.mxu0 %v734
        %950 = vmatprep.subr.bf16.mxu0 0
        %951 = vmatpush1.bf16.msra.mxu0 %v733
        %952 = vmatprep.subr.bf16.mxu0 0
        %953 = vmatpush1.bf16.msra.mxu0 %v732
        %954 = vmatprep.subr.bf16.mxu0 0
        %955 = vmatpush1.bf16.msra.mxu0 %v731
        %956 = vmatprep.subr.bf16.mxu0 0
        %957 = vmatpush2.bf16.msra.mxu0 %v746
        %958 = vmatprep.subr.bf16.mxu0 0
        %959 = vmatpush2.bf16.msra.mxu0 %v745
        %960 = vmatprep.subr.bf16.mxu0 0
        %961 = vmatpush2.bf16.msra.mxu0 %v744
        %962 = vmatprep.subr.bf16.mxu0 0
        %963 = vmatpush2.bf16.msra.mxu0 %v743
        %964 = vmatprep.subr.bf16.mxu0 0
        %965 = vmatpush2.bf16.msra.mxu0 %v742
        %966 = vmatprep.subr.bf16.mxu0 0
        %967 = vmatpush2.bf16.msra.mxu0 %v741
        %968 = vmatprep.subr.bf16.mxu0 0
        %969 = vmatpush2.bf16.msra.mxu0 %v740
        %970 = vmatprep.subr.bf16.mxu0 0
        %971 = vmatpush2.bf16.msra.mxu0 %v739
        %972 = vmatprep.mubr.bf16.mxu0 %v462
        %973 = vmatmul.mubr.bf16.gmra.mxu0 %v461
        %v974 = vpop.f32.mrf.mxu0
        %v975 = vadd.f32 %v814, %v974
        %v976 = vpop.f32.mrf.mxu0
        %v977 = vpop.f32.mrf.mxu0
        %v978 = vadd.f32 %v817, %v977
        %v979 = vpop.f32.mrf.mxu0
        %980 = vmatprep.mubr.bf16.mxu0 %v466
        %981 = vmatmul.mubr.bf16.gmra.mxu0 %v465
        %v982 = vpop.f32.mrf.mxu0
        %v983 = vadd.f32 %v822, %v982
        %v984 = vpop.f32.mrf.mxu0
        %v985 = vpop.f32.mrf.mxu0
        %v986 = vadd.f32 %v825, %v985
        %v987 = vpop.f32.mrf.mxu0
        %988 = vmatprep.mubr.bf16.mxu0 %v470
        %989 = vmatmul.mubr.bf16.gmra.mxu0 %v469
        %v990 = vpop.f32.mrf.mxu0
        %v991 = vadd.f32 %v830, %v990
        %v992 = vpop.f32.mrf.mxu0
        %v993 = vpop.f32.mrf.mxu0
        %v994 = vadd.f32 %v833, %v993
        %v995 = vpop.f32.mrf.mxu0
        %996 = vmatprep.mubr.bf16.mxu0 %v474
        %997 = vmatmul.mubr.bf16.gmra.mxu0 %v473
        %v998 = vpop.f32.mrf.mxu0
        %v999 = vadd.f32 %v838, %v998
        %v1000 = vpop.f32.mrf.mxu0
        %v1001 = vpop.f32.mrf.mxu0
        %v1002 = vadd.f32 %v841, %v1001
        %v1003 = vpop.f32.mrf.mxu0
        %1004 = vmatprep.mubr.bf16.mxu0 %v478
        %1005 = vmatmul.mubr.bf16.gmra.mxu0 %v477
        %v1006 = vpop.f32.mrf.mxu0
        %v1007 = vadd.f32 %v846, %v1006
        %v1008 = vpop.f32.mrf.mxu0
        %v1009 = vpop.f32.mrf.mxu0
        %v1010 = vadd.f32 %v849, %v1009
        %v1011 = vpop.f32.mrf.mxu0
        %1012 = vmatprep.mubr.bf16.mxu0 %v482
        %1013 = vmatmul.mubr.bf16.gmra.mxu0 %v481
        %v1014 = vpop.f32.mrf.mxu0
        %v1015 = vadd.f32 %v854, %v1014
        %v1016 = vpop.f32.mrf.mxu0
        %v1017 = vpop.f32.mrf.mxu0
        %v1018 = vadd.f32 %v857, %v1017
        %v1019 = vpop.f32.mrf.mxu0
        %1020 = vmatprep.mubr.bf16.mxu0 %v486
        %1021 = vmatmul.mubr.bf16.gmra.mxu0 %v485
        %v1022 = vpop.f32.mrf.mxu0
        %v1023 = vadd.f32 %v862, %v1022
        %v1024 = vpop.f32.mrf.mxu0
        %v1025 = vpop.f32.mrf.mxu0
        %v1026 = vadd.f32 %v865, %v1025
        %v1027 = vpop.f32.mrf.mxu0
        %1028 = vmatprep.mubr.bf16.mxu0 %v490
        %1029 = vmatmul.mubr.bf16.gmra.mxu0 %v489
        %v1030 = vpop.f32.mrf.mxu0
        %v1031 = vadd.f32 %v870, %v1030
        %v1032 = vpop.f32.mrf.mxu0
        %v1033 = vpop.f32.mrf.mxu0
        %v1034 = vadd.f32 %v873, %v1033
        %v1035 = vpop.f32.mrf.mxu0
        %1036 = vmatprep.mubr.bf16.mxu0 %v494
        %1037 = vmatmul.mubr.bf16.gmra.mxu0 %v493
        %v1038 = vpop.f32.mrf.mxu0
        %v1039 = vadd.f32 %v878, %v1038
        %v1040 = vpop.f32.mrf.mxu0
        %v1041 = vpop.f32.mrf.mxu0
        %v1042 = vadd.f32 %v881, %v1041
        %v1043 = vpop.f32.mrf.mxu0
        %1044 = vmatprep.mubr.bf16.mxu0 %v498
        %1045 = vmatmul.mubr.bf16.gmra.mxu0 %v497
        %v1046 = vpop.f32.mrf.mxu0
        %v1047 = vadd.f32 %v886, %v1046
        %v1048 = vpop.f32.mrf.mxu0
        %v1049 = vpop.f32.mrf.mxu0
        %v1050 = vadd.f32 %v889, %v1049
        %v1051 = vpop.f32.mrf.mxu0
        %1052 = vmatprep.mubr.bf16.mxu0 %v502
        %1053 = vmatmul.mubr.bf16.gmra.mxu0 %v501
        %v1054 = vpop.f32.mrf.mxu0
        %v1055 = vadd.f32 %v894, %v1054
        %v1056 = vpop.f32.mrf.mxu0
        %v1057 = vpop.f32.mrf.mxu0
        %v1058 = vadd.f32 %v897, %v1057
        %v1059 = vpop.f32.mrf.mxu0
        %1060 = vmatprep.mubr.bf16.mxu0 %v506
        %1061 = vmatmul.mubr.bf16.gmra.mxu0 %v505
        %v1062 = vpop.f32.mrf.mxu0
        %v1063 = vadd.f32 %v902, %v1062
        %v1064 = vpop.f32.mrf.mxu0
        %v1065 = vpop.f32.mrf.mxu0
        %v1066 = vadd.f32 %v905, %v1065
        %v1067 = vpop.f32.mrf.mxu0
        %1068 = vmatprep.mubr.bf16.mxu0 %v510
        %1069 = vmatmul.mubr.bf16.gmra.mxu0 %v509
        %v1070 = vpop.f32.mrf.mxu0
        %v1071 = vadd.f32 %v910, %v1070
        %v1072 = vpop.f32.mrf.mxu0
        %v1073 = vpop.f32.mrf.mxu0
        %v1074 = vadd.f32 %v913, %v1073
        %v1075 = vpop.f32.mrf.mxu0
        %1076 = vmatprep.mubr.bf16.mxu0 %v514
        %1077 = vmatmul.mubr.bf16.gmra.mxu0 %v513
        %v1078 = vpop.f32.mrf.mxu0
        %v1079 = vadd.f32 %v918, %v1078
        %v1080 = vpop.f32.mrf.mxu0
        %v1081 = vpop.f32.mrf.mxu0
        %v1082 = vadd.f32 %v921, %v1081
        %v1083 = vpop.f32.mrf.mxu0
        %1084 = vmatprep.mubr.bf16.mxu0 %v518
        %1085 = vmatmul.mubr.bf16.gmra.mxu0 %v517
        %v1086 = vpop.f32.mrf.mxu0
        %v1087 = vadd.f32 %v926, %v1086
        %v1088 = vpop.f32.mrf.mxu0
        %v1089 = vpop.f32.mrf.mxu0
        %v1090 = vadd.f32 %v929, %v1089
        %v1091 = vpop.f32.mrf.mxu0
        %1092 = vmatprep.mubr.bf16.mxu0 %v522
        %1093 = vmatmul.mubr.bf16.gmra.mxu0 %v521
        %v1094 = vpop.f32.mrf.mxu0
        %v1095 = vadd.f32 %v934, %v1094
        %v1096 = vpop.f32.mrf.mxu0
        %v1097 = vpop.f32.mrf.mxu0
        %v1098 = vadd.f32 %v937, %v1097
        %v1099 = vpop.f32.mrf.mxu0
        %1100 = vdwg.mxu0
        %v1101 = vadd.f32 %v299, %v975
        %v1102 = vadd.f32 %v300, %v978
        %v1103 = vadd.f32 %v301, %v983
        %v1104 = vadd.f32 %v302, %v986
        %v1105 = vadd.f32 %v303, %v991
        %v1106 = vadd.f32 %v304, %v994
        %v1107 = vadd.f32 %v305, %v999
        %v1108 = vadd.f32 %v306, %v1002
        %v1109 = vadd.f32 %v307, %v1007
        %v1110 = vadd.f32 %v308, %v1010
        %v1111 = vadd.f32 %v309, %v1015
        %v1112 = vadd.f32 %v310, %v1018
        %v1113 = vadd.f32 %v311, %v1023
        %v1114 = vadd.f32 %v312, %v1026
        %v1115 = vadd.f32 %v313, %v1031
        %v1116 = vadd.f32 %v314, %v1034
        %v1117 = vadd.f32 %v315, %v1039
        %v1118 = vadd.f32 %v316, %v1042
        %v1119 = vadd.f32 %v317, %v1047
        %v1120 = vadd.f32 %v318, %v1050
        %v1121 = vadd.f32 %v319, %v1055
        %v1122 = vadd.f32 %v320, %v1058
        %v1123 = vadd.f32 %v321, %v1063
        %v1124 = vadd.f32 %v322, %v1066
        %v1125 = vadd.f32 %v323, %v1071
        %v1126 = vadd.f32 %v324, %v1074
        %v1127 = vadd.f32 %v325, %v1079
        %v1128 = vadd.f32 %v326, %v1082
        %v1129 = vadd.f32 %v327, %v1087
        %v1130 = vadd.f32 %v328, %v1090
        %v1131 = vadd.f32 %v329, %v1095
        %v1132 = vadd.f32 %v330, %v1098
        %1133 = vst [vmem:[#allocation2] sm:$0xff] %v1101
        %1134 = vst [vmem:[#allocation2 + $0x8] sm:$0xff] %v1102
        %1135 = vst [vmem:[#allocation2 + $0x10] sm:$0xff] %v1103
        %1136 = vst [vmem:[#allocation2 + $0x18] sm:$0xff] %v1104
        %1137 = vst [vmem:[#allocation2 + $0x20] sm:$0xff] %v1105
        %1138 = vst [vmem:[#allocation2 + $0x28] sm:$0xff] %v1106
        %1139 = vst [vmem:[#allocation2 + $0x30] sm:$0xff] %v1107
        %1140 = vst [vmem:[#allocation2 + $0x38] sm:$0xff] %v1108
        %1141 = vst [vmem:[#allocation2 + $0x40] sm:$0xff] %v1109
        %1142 = vst [vmem:[#allocation2 + $0x48] sm:$0xff] %v1110
        %1143 = vst [vmem:[#allocation2 + $0x50] sm:$0xff] %v1111
        %1144 = vst [vmem:[#allocation2 + $0x58] sm:$0xff] %v1112
        %1145 = vst [vmem:[#allocation2 + $0x60] sm:$0xff] %v1113
        %1146 = vst [vmem:[#allocation2 + $0x68] sm:$0xff] %v1114
        %1147 = vst [vmem:[#allocation2 + $0x70] sm:$0xff] %v1115
        %1148 = vst [vmem:[#allocation2 + $0x78] sm:$0xff] %v1116
        %1149 = vst [vmem:[#allocation2 + $0x80] sm:$0xff] %v1117
        %1150 = vst [vmem:[#allocation2 + $0x88] sm:$0xff] %v1118
        %1151 = vst [vmem:[#allocation2 + $0x90] sm:$0xff] %v1119
        %1152 = vst [vmem:[#allocation2 + $0x98] sm:$0xff] %v1120
        %1153 = vst [vmem:[#allocation2 + $0xa0] sm:$0xff] %v1121
        %1154 = vst [vmem:[#allocation2 + $0xa8] sm:$0xff] %v1122
        %1155 = vst [vmem:[#allocation2 + $0xb0] sm:$0xff] %v1123
        %1156 = vst [vmem:[#allocation2 + $0xb8] sm:$0xff] %v1124
        %1157 = vst [vmem:[#allocation2 + $0xc0] sm:$0xff] %v1125
        %1158 = vst [vmem:[#allocation2 + $0xc8] sm:$0xff] %v1126
        %1159 = vst [vmem:[#allocation2 + $0xd0] sm:$0xff] %v1127
        %1160 = vst [vmem:[#allocation2 + $0xd8] sm:$0xff] %v1128
        %1161 = vst [vmem:[#allocation2 + $0xe0] sm:$0xff] %v1129
        %1162 = vst [vmem:[#allocation2 + $0xe8] sm:$0xff] %v1130
        %1163 = vst [vmem:[#allocation2 + $0xf0] sm:$0xff] %v1131
        %1164 = vst [vmem:[#allocation2 + $0xf8] sm:$0xff] %v1132
        %p1165 = scmp.eq.s32.totalorder %s28, 1
        // Predicated region
        $region49: #{tpu_custom_call.1} parent=31 // pred_check
          %p1166 = pneg %p1165
        $region50: #{tpu_custom_call.1} parent=31 // pred_check_branch
          %1168 = sbr.rel (%p1166) target = $region52
        $region51: #{tpu_custom_call.1} parent=31 // pred_region
          %v1169 = vld [vmem:[#allocation2] sm:$0xff]
          %v1170 = vld [vmem:[#allocation2 + $0x8] sm:$0xff]
          %v1171 = vld [vmem:[#allocation2 + $0x10] sm:$0xff]
          %v1172 = vld [vmem:[#allocation2 + $0x18] sm:$0xff]
          %v1173 = vld [vmem:[#allocation2 + $0x20] sm:$0xff]
          %v1174 = vld [vmem:[#allocation2 + $0x28] sm:$0xff]
          %v1175 = vld [vmem:[#allocation2 + $0x30] sm:$0xff]
          %v1176 = vld [vmem:[#allocation2 + $0x38] sm:$0xff]
          %v1177 = vld [vmem:[#allocation2 + $0x40] sm:$0xff]
          %v1178 = vld [vmem:[#allocation2 + $0x48] sm:$0xff]
          %v1179 = vld [vmem:[#allocation2 + $0x50] sm:$0xff]
          %v1180 = vld [vmem:[#allocation2 + $0x58] sm:$0xff]
          %v1181 = vld [vmem:[#allocation2 + $0x60] sm:$0xff]
          %v1182 = vld [vmem:[#allocation2 + $0x68] sm:$0xff]
          %v1183 = vld [vmem:[#allocation2 + $0x70] sm:$0xff]
          %v1184 = vld [vmem:[#allocation2 + $0x78] sm:$0xff]
          %v1185 = vld [vmem:[#allocation2 + $0x80] sm:$0xff]
          %v1186 = vld [vmem:[#allocation2 + $0x88] sm:$0xff]
          %v1187 = vld [vmem:[#allocation2 + $0x90] sm:$0xff]
          %v1188 = vld [vmem:[#allocation2 + $0x98] sm:$0xff]
          %v1189 = vld [vmem:[#allocation2 + $0xa0] sm:$0xff]
          %v1190 = vld [vmem:[#allocation2 + $0xa8] sm:$0xff]
          %v1191 = vld [vmem:[#allocation2 + $0xb0] sm:$0xff]
          %v1192 = vld [vmem:[#allocation2 + $0xb8] sm:$0xff]
          %v1193 = vld [vmem:[#allocation2 + $0xc0] sm:$0xff]
          %v1194 = vld [vmem:[#allocation2 + $0xc8] sm:$0xff]
          %v1195 = vld [vmem:[#allocation2 + $0xd0] sm:$0xff]
          %v1196 = vld [vmem:[#allocation2 + $0xd8] sm:$0xff]
          %v1197 = vld [vmem:[#allocation2 + $0xe0] sm:$0xff]
          %v1198 = vld [vmem:[#allocation2 + $0xe8] sm:$0xff]
          %v1199 = vld [vmem:[#allocation2 + $0xf0] sm:$0xff]
          %v1200 = vld [vmem:[#allocation2 + $0xf8] sm:$0xff]
          %v1201 = vld [vmem:[#allocation8] sm:$0x1]
          %v1203 = vlaneseq
          %v1204 = vshrl.u32 %v1203, 7
          %v1205 = vsub.s32 0, %v1204
          %v1206 = vrot.slane %v1201, %v1205
          %v1208 = vadd.f32 %v1169, %v1206
          %v1209 = vadd.f32 %v1170, %v1206
          %v1210 = vadd.f32 %v1171, %v1206
          %v1211 = vadd.f32 %v1172, %v1206
          %v1212 = vadd.f32 %v1173, %v1206
          %v1213 = vadd.f32 %v1174, %v1206
          %v1214 = vadd.f32 %v1175, %v1206
          %v1215 = vadd.f32 %v1176, %v1206
          %v1216 = vadd.f32 %v1177, %v1206
          %v1217 = vadd.f32 %v1178, %v1206
          %v1218 = vadd.f32 %v1179, %v1206
          %v1219 = vadd.f32 %v1180, %v1206
          %v1220 = vadd.f32 %v1181, %v1206
          %v1221 = vadd.f32 %v1182, %v1206
          %v1222 = vadd.f32 %v1183, %v1206
          %v1223 = vadd.f32 %v1184, %v1206
          %v1224 = vadd.f32 %v1185, %v1206
          %v1225 = vadd.f32 %v1186, %v1206
          %v1226 = vadd.f32 %v1187, %v1206
          %v1227 = vadd.f32 %v1188, %v1206
          %v1228 = vadd.f32 %v1189, %v1206
          %v1229 = vadd.f32 %v1190, %v1206
          %v1230 = vadd.f32 %v1191, %v1206
          %v1231 = vadd.f32 %v1192, %v1206
          %v1232 = vadd.f32 %v1193, %v1206
          %v1233 = vadd.f32 %v1194, %v1206
          %v1234 = vadd.f32 %v1195, %v1206
          %v1235 = vadd.f32 %v1196, %v1206
          %v1236 = vadd.f32 %v1197, %v1206
          %v1237 = vadd.f32 %v1198, %v1206
          %v1238 = vadd.f32 %v1199, %v1206
          %v1239 = vadd.f32 %v1200, %v1206
          %v1240 = vmax.f32 %v1208, 0.0
          %v1241 = vmax.f32 %v1209, 0.0
          %v1242 = vmax.f32 %v1210, 0.0
          %v1243 = vmax.f32 %v1211, 0.0
          %v1244 = vmax.f32 %v1212, 0.0
          %v1245 = vmax.f32 %v1213, 0.0
          %v1246 = vmax.f32 %v1214, 0.0
          %v1247 = vmax.f32 %v1215, 0.0
          %v1248 = vmax.f32 %v1216, 0.0
          %v1249 = vmax.f32 %v1217, 0.0
          %v1250 = vmax.f32 %v1218, 0.0
          %v1251 = vmax.f32 %v1219, 0.0
          %v1252 = vmax.f32 %v1220, 0.0
          %v1253 = vmax.f32 %v1221, 0.0
          %v1254 = vmax.f32 %v1222, 0.0
          %v1255 = vmax.f32 %v1223, 0.0
          %v1256 = vmax.f32 %v1224, 0.0
          %v1257 = vmax.f32 %v1225, 0.0
          %v1258 = vmax.f32 %v1226, 0.0
          %v1259 = vmax.f32 %v1227, 0.0
          %v1260 = vmax.f32 %v1228, 0.0
          %v1261 = vmax.f32 %v1229, 0.0
          %v1262 = vmax.f32 %v1230, 0.0
          %v1263 = vmax.f32 %v1231, 0.0
          %v1264 = vmax.f32 %v1232, 0.0
          %v1265 = vmax.f32 %v1233, 0.0
          %v1266 = vmax.f32 %v1234, 0.0
          %v1267 = vmax.f32 %v1235, 0.0
          %v1268 = vmax.f32 %v1236, 0.0
          %v1269 = vmax.f32 %v1237, 0.0
          %v1270 = vmax.f32 %v1238, 0.0
          %v1271 = vmax.f32 %v1239, 0.0
          %v1272 = vpack.c.bf16 %v1241, %v1240
          %v1273 = vpack.c.bf16 %v1243, %v1242
          %v1274 = vpack.c.bf16 %v1245, %v1244
          %v1275 = vpack.c.bf16 %v1247, %v1246
          %v1276 = vpack.c.bf16 %v1249, %v1248
          %v1277 = vpack.c.bf16 %v1251, %v1250
          %v1278 = vpack.c.bf16 %v1253, %v1252
          %v1279 = vpack.c.bf16 %v1255, %v1254
          %v1280 = vpack.c.bf16 %v1257, %v1256
          %v1281 = vpack.c.bf16 %v1259, %v1258
          %v1282 = vpack.c.bf16 %v1261, %v1260
          %v1283 = vpack.c.bf16 %v1263, %v1262
          %v1284 = vpack.c.bf16 %v1265, %v1264
          %v1285 = vpack.c.bf16 %v1267, %v1266
          %v1286 = vpack.c.bf16 %v1269, %v1268
          %v1287 = vpack.c.bf16 %v1271, %v1270
          %v1304 = vunpack.c.l.b16 %v1272
          %v1305 = vunpack.c.h.b16 %v1272
          %v1306 = vunpack.c.l.b16 %v1273
          %v1307 = vunpack.c.h.b16 %v1273
          %v1308 = vunpack.c.l.b16 %v1274
          %v1309 = vunpack.c.h.b16 %v1274
          %v1310 = vunpack.c.l.b16 %v1275
          %v1311 = vunpack.c.h.b16 %v1275
          %v1312 = vunpack.c.l.b16 %v1276
          %v1313 = vunpack.c.h.b16 %v1276
          %v1314 = vunpack.c.l.b16 %v1277
          %v1315 = vunpack.c.h.b16 %v1277
          %v1316 = vunpack.c.l.b16 %v1278
          %v1317 = vunpack.c.h.b16 %v1278
          %v1318 = vunpack.c.l.b16 %v1279
          %v1319 = vunpack.c.h.b16 %v1279
          %v1320 = vunpack.c.l.b16 %v1280
          %v1321 = vunpack.c.h.b16 %v1280
          %v1322 = vunpack.c.l.b16 %v1281
          %v1323 = vunpack.c.h.b16 %v1281
          %v1324 = vunpack.c.l.b16 %v1282
          %v1325 = vunpack.c.h.b16 %v1282
          %v1326 = vunpack.c.l.b16 %v1283
          %v1327 = vunpack.c.h.b16 %v1283
          %v1328 = vunpack.c.l.b16 %v1284
          %v1329 = vunpack.c.h.b16 %v1284
          %v1330 = vunpack.c.l.b16 %v1285
          %v1331 = vunpack.c.h.b16 %v1285
          %v1332 = vunpack.c.l.b16 %v1286
          %v1333 = vunpack.c.h.b16 %v1286
          %v1334 = vunpack.c.l.b16 %v1287
          %v1335 = vunpack.c.h.b16 %v1287
          %v1336 = vpack.c.b16 %v1304, %v1304
          %v1337 = vpack.c.b16 %v1305, %v1305
          %v1338 = vpack.c.b16 %v1306, %v1306
          %v1339 = vpack.c.b16 %v1307, %v1307
          %v1340 = vpack.c.b16 %v1308, %v1308
          %v1341 = vpack.c.b16 %v1309, %v1309
          %v1342 = vpack.c.b16 %v1310, %v1310
          %v1343 = vpack.c.b16 %v1311, %v1311
          %v1344 = vpack.c.b16 %v1312, %v1312
          %v1345 = vpack.c.b16 %v1313, %v1313
          %v1346 = vpack.c.b16 %v1314, %v1314
          %v1347 = vpack.c.b16 %v1315, %v1315
          %v1348 = vpack.c.b16 %v1316, %v1316
          %v1349 = vpack.c.b16 %v1317, %v1317
          %v1350 = vpack.c.b16 %v1318, %v1318
          %v1351 = vpack.c.b16 %v1319, %v1319
          %v1352 = vpack.c.b16 %v1320, %v1320
          %v1353 = vpack.c.b16 %v1321, %v1321
          %v1354 = vpack.c.b16 %v1322, %v1322
          %v1355 = vpack.c.b16 %v1323, %v1323
          %v1356 = vpack.c.b16 %v1324, %v1324
          %v1357 = vpack.c.b16 %v1325, %v1325
          %v1358 = vpack.c.b16 %v1326, %v1326
          %v1359 = vpack.c.b16 %v1327, %v1327
          %v1360 = vpack.c.b16 %v1328, %v1328
          %v1361 = vpack.c.b16 %v1329, %v1329
          %v1362 = vpack.c.b16 %v1330, %v1330
          %v1363 = vpack.c.b16 %v1331, %v1331
          %v1364 = vpack.c.b16 %v1332, %v1332
          %v1365 = vpack.c.b16 %v1333, %v1333
          %v1366 = vpack.c.b16 %v1334, %v1334
          %v1367 = vpack.c.b16 %v1335, %v1335
          %1400 = vst [vmem:[%s257] sm:$0xf] %v1336
          %1401 = vst [vmem:[%s257 + $0x4] sm:$0xf] %v1337
          %1402 = vst [vmem:[%s257 + $0x8] sm:$0xf] %v1338
          %1403 = vst [vmem:[%s257 + $0xc] sm:$0xf] %v1339
          %1404 = vst [vmem:[%s257 + $0x10] sm:$0xf] %v1340
          %1405 = vst [vmem:[%s257 + $0x14] sm:$0xf] %v1341
          %1406 = vst [vmem:[%s257 + $0x18] sm:$0xf] %v1342
          %1407 = vst [vmem:[%s257 + $0x1c] sm:$0xf] %v1343
          %1408 = vst [vmem:[%s257 + $0x20] sm:$0xf] %v1344
          %1409 = vst [vmem:[%s257 + $0x24] sm:$0xf] %v1345
          %1410 = vst [vmem:[%s257 + $0x28] sm:$0xf] %v1346
          %1411 = vst [vmem:[%s257 + $0x2c] sm:$0xf] %v1347
          %1412 = vst [vmem:[%s257 + $0x30] sm:$0xf] %v1348
          %1413 = vst [vmem:[%s257 + $0x34] sm:$0xf] %v1349
          %1414 = vst [vmem:[%s257 + $0x38] sm:$0xf] %v1350
          %1415 = vst [vmem:[%s257 + $0x3c] sm:$0xf] %v1351
          %1416 = vst [vmem:[%s257 + $0x40] sm:$0xf] %v1352
          %1417 = vst [vmem:[%s257 + $0x44] sm:$0xf] %v1353
          %1418 = vst [vmem:[%s257 + $0x48] sm:$0xf] %v1354
          %1419 = vst [vmem:[%s257 + $0x4c] sm:$0xf] %v1355
          %1420 = vst [vmem:[%s257 + $0x50] sm:$0xf] %v1356
          %1421 = vst [vmem:[%s257 + $0x54] sm:$0xf] %v1357
          %1422 = vst [vmem:[%s257 + $0x58] sm:$0xf] %v1358
          %1423 = vst [vmem:[%s257 + $0x5c] sm:$0xf] %v1359
          %1424 = vst [vmem:[%s257 + $0x60] sm:$0xf] %v1360
          %1425 = vst [vmem:[%s257 + $0x64] sm:$0xf] %v1361
          %1426 = vst [vmem:[%s257 + $0x68] sm:$0xf] %v1362
          %1427 = vst [vmem:[%s257 + $0x6c] sm:$0xf] %v1363
          %1428 = vst [vmem:[%s257 + $0x70] sm:$0xf] %v1364
          %1429 = vst [vmem:[%s257 + $0x74] sm:$0xf] %v1365
          %1430 = vst [vmem:[%s257 + $0x78] sm:$0xf] %v1366
          %1431 = vst [vmem:[%s257 + $0x7c] sm:$0xf] %v1367
        $region52: #{tpu_custom_call.1} parent=31 // pred_fallthru
          _
        %s1432 = sand.u32 %s118, 1
        %s1433 = scalar_lea.sflag [#allocation5], %s1432
        %s1434 = sand.u32 %s118, 1
        %s1435 = smul.addr %s1434, 128
        %s1436 = scalar_lea.vmem [#allocation9], %s1435
        // Predicated region
        $region53: #{tpu_custom_call.1} parent=31 // pred_check
          %p1437 = pneg %p128
        $region54: #{tpu_custom_call.1} parent=31 // pred_check_branch
          %1439 = sbr.rel (%p1437) target = $region56
        $region55: #{tpu_custom_call.1} parent=31 // pred_region
          %s1440 = smul.u32 32, %s27
          %s1442 = ssub.s32 2048, 2048
          %1443 = vsyncadd %s1433, %s1442
          %s1444 = smul.addr %s1440, 64
          %s1445 = scalar_lea.hbm %s3, %s1444
          %s1446 = sshll.u32 %s1436, 4
          %s1447 = int_to_ptr.vmem [resolvable:$true] %s1446
          %1452 = dma.vmem_to_hbm [thread:$0]  %s1447, 2048, %s1445, %s1433, 64, 64, 4
        $region56: #{tpu_custom_call.1} parent=31 // pred_fallthru
          _
      $region32: #{tpu_custom_call.1} parent=5 // pred_fallthru
        _
      %p1453 = scmp.le.s32.totalorder 2, %s18
      // Predicated region
      $region57: #{tpu_custom_call.1} parent=5 // pred_check
        %p1454 = pneg %p1453
      $region58: #{tpu_custom_call.1} parent=5 // pred_check_branch
        %1456 = sbr.rel (%p1454) target = $region60
      $region59: #{tpu_custom_call.1} parent=5 // pred_region
        %s1457 = ssub.s32 %s18, 2
        // Predicated region
        $region61: #{tpu_custom_call.1} parent=59 // pred_check
          %p1458 = pneg %p134
        $region62: #{tpu_custom_call.1} parent=59 // pred_check_branch
          %1460 = sbr.rel (%p1458) target = $region64
        $region63: #{tpu_custom_call.1} parent=59 // pred_region
          %s1461 = sand.u32 %s119, 1
          %s1462 = scalar_lea.sflag [#allocation5], %s1461
          %s1463 = sand.u32 %s119, 1
          %s1464 = smul.addr %s1463, 128
          %s1465 = scalar_lea.vmem [#allocation9], %s1464
          %1466 = dma.done %s1462, 2048
        $region64: #{tpu_custom_call.1} parent=59 // pred_fallthru
          _
      $region60: #{tpu_custom_call.1} parent=5 // pred_fallthru
        _
    $region6: #{tpu_custom_call.1} parent=1 // loop_footer
      %s22 = sadd.s32 1, %s18
    $region7: #{tpu_custom_call.1} parent=1 // loop_footer_branch
      %17 = sbr.rel target = $region3
    $region8: #{tpu_custom_call.1} parent=1 // loop_exit
      _
    %1467 = vsyncpa [#allocation4], 1
    %s1468 = scalar_lea.sflag [#allocation4], 1
    %1469 = vsyncpa %s1468, 1
    %1470 = vsyncpa [#allocation7], 1
    %s1471 = scalar_lea.sflag [#allocation7], 1
    %1472 = vsyncpa %s1471, 1
    %1473 = vsyncpa [#allocation5], 1
    %s1474 = scalar_lea.sflag [#allocation5], 1
    %1475 = vsyncpa %s1474, 1

</llo_original>
